<compile_context>
chip_gen: v5e
topology: v5e:2x2
jax: 0.10.0
libtpu: 0.0.40
codegen_flags: <defaults>
</compile_context>

<pallas_src>
import jax
import jax.numpy as jnp
from jax.experimental import pallas as pl
from jax.experimental.pallas import tpu as pltpu


HIDDEN = 128


def _round_up(n, m):
    return ((n + m - 1) // m) * m


def mlp_kernel(x_ref,
               w1_ref, b1_ref,
               w2_ref, b2_ref,
               w3_ref, b3_ref,
               w4_ref, b4_ref,
               w5_ref, b5_ref,
               out_ref):
    """One batch tile of the fused MLP. x_ref: [TM, K_pad] bf16, out_ref: [TM, N_pad] bf16."""
    h = x_ref[...]  # bf16

    # Layers 1..4: bf16 MXU matmul with fp32 accumulate, bias + ReLU in fp32,
    # then cast back down to bf16 for the next MXU pass.
    for w_ref, b_ref in ((w1_ref, b1_ref), (w2_ref, b2_ref),
                         (w3_ref, b3_ref), (w4_ref, b4_ref)):
        acc = jnp.dot(h, w_ref[...], preferred_element_type=jnp.float32)
        acc = jnp.maximum(acc + b_ref[...], 0.0)
        h = acc.astype(jnp.bfloat16)

    # Output layer: Linear + Sigmoid.  tanh formulation is numerically stable
    # (no fp32 overflow for very negative logits) and lands on the EUP slot.
    logits = jnp.dot(h, w5_ref[...], preferred_element_type=jnp.float32) + b5_ref[...]
    out_ref[...] = (0.5 * (jnp.tanh(0.5 * logits) + 1.0)).astype(out_ref.dtype)


def neural_network_max_util(x, params, *, tm_hint=1024):
    """x: [B, ...] -> flatten -> [B, input_dim]; returns [B, output_dim] (fp32)."""
    B = x.shape[0]
    x2d = x.reshape(B, -1)                               # nn.Flatten (wrapper glue)
    in_dim = x2d.shape[1]

    # Defensive bias reshape: accept (fan_out,) or (1, fan_out).
    layers = [(jnp.asarray(w, jnp.float32), jnp.asarray(b, jnp.float32).reshape(1, -1))
              for (w, b) in params]
    (w1, b1), (w2, b2), (w3, b3), (w4, b4), (w5, b5) = layers
    out_dim = w5.shape[1]

    # Lane-dense padding: K of the first matmul and N of the last matmul -> mult. of 128.
    in_pad = _round_up(in_dim, 128)
    out_pad = _round_up(out_dim, 128)

    # ---- Generation-aware VMEM budget --------------------------------------
    try:
        info = pltpu.get_tpu_info()
        vmem_cap = getattr(info, "vmem_capacity_bytes", 64 * 1024 * 1024)
        vmem_limit = int(min(vmem_cap * 3 // 4, 96 * 1024 * 1024))   # 48 MiB on v7x, 96 MiB on v5e/v6e
    except Exception:
        vmem_limit = 32 * 1024 * 1024

    # ---- Adaptive batch tile (multiple of 16 for bf16 (16,128) tiles) ------
    resident_bytes = ((in_pad * HIDDEN + 3 * HIDDEN * HIDDEN + HIDDEN * out_pad) * 2
                      + (4 * HIDDEN + out_pad) * 4)                  # single-buffered weights/biases
    per_row_bytes = 2 * (in_pad * 2 + out_pad * 2)                   # double-buffered x(bf16) + out(bf16)
    avail = max(vmem_limit // 2 - resident_bytes, per_row_bytes * 16)
    tm = max(16, min(tm_hint, avail // per_row_bytes) // 16 * 16)

    b16 = _round_up(B, 16)
    tm = min(tm, b16)
    # v7x megacore: make sure the batch grid has >=2 steps whenever B allows it.
    if b16 > 16 and pl.cdiv(b16, tm) < 2:
        tm = _round_up(pl.cdiv(b16, 2), 16)
    b_pad = _round_up(B, tm)
    grid = (b_pad // tm,)

    # ---- Pad + cast operands outside the kernel (fused cast+pad, no scatter) ----
    x_bf = x2d.astype(jnp.bfloat16)
    if (b_pad - B) or (in_pad - in_dim):
        x_p = jnp.pad(x_bf, ((0, b_pad - B), (0, in_pad - in_dim)))
    else:
        x_p = x_bf
    w1p = jnp.pad(w1.astype(jnp.bfloat16), ((0, in_pad - in_dim), (0, 0)))
    w5p = jnp.pad(w5.astype(jnp.bfloat16), ((0, 0), (0, out_pad - out_dim)))
    b5p = jnp.pad(b5, ((0, 0), (0, out_pad - out_dim)))
    w2p, w3p, w4p = (w.astype(jnp.bfloat16) for w in (w2, w3, w4))
    b1p, b2p, b3p, b4p = b1, b2, b3, b4

    flops = 2 * b_pad * (in_pad * HIDDEN + 3 * HIDDEN * HIDDEN + HIDDEN * out_pad)
    bytes_accessed = (
        b_pad * in_pad * 2                                                 # x (bf16)
        + (in_pad * HIDDEN + 3 * HIDDEN * HIDDEN + HIDDEN * out_pad) * 2   # weights (bf16)
        + (4 * HIDDEN + out_pad) * 4                                       # biases (f32)
        + b_pad * out_pad * 2)                                             # output (bf16)
    cost = pl.CostEstimate(flops=flops,
                           transcendentals=b_pad * out_pad,
                           bytes_accessed=bytes_accessed)

    def run(single_buffer_weights):
        def const(shape):
            # Weights/biases: same block every grid step -> VMEM-resident.
            if single_buffer_weights:
                return pl.BlockSpec(shape, lambda i: (0, 0),
                                    pipeline_mode=pl.Buffered(1))
            return pl.BlockSpec(shape, lambda i: (0, 0))

        in_specs = [
            pl.BlockSpec((tm, in_pad), lambda i: (i, 0)),   # x tile (streamed)
            const((in_pad, HIDDEN)), const((1, HIDDEN)),    # w1, b1
            const((HIDDEN, HIDDEN)), const((1, HIDDEN)),    # w2, b2
            const((HIDDEN, HIDDEN)), const((1, HIDDEN)),    # w3, b3
            const((HIDDEN, HIDDEN)), const((1, HIDDEN)),    # w4, b4
            const((HIDDEN, out_pad)), const((1, out_pad)),  # w5, b5
        ]
        out_specs = pl.BlockSpec((tm, out_pad), lambda i: (i, 0))

        return pl.pallas_call(
            mlp_kernel,
            out_shape=jax.ShapeDtypeStruct((b_pad, out_pad), jnp.bfloat16),
            grid=grid,
            in_specs=in_specs,
            out_specs=out_specs,
            compiler_params=pltpu.CompilerParams(
                dimension_semantics=("parallel",),          # batch axis -> 2 TCs on v7x
                vmem_limit_bytes=vmem_limit,
            ),
            cost_estimate=cost,
        )(x_p, w1p, b1p, w2p, b2p, w3p, b3p, w4p, b4p, w5p, b5p)

    try:
        out_padded = run(single_buffer_weights=True)
    except Exception:
        # Fallback: default double-buffering if this JAX build rejects pipeline_mode.
        out_padded = run(single_buffer_weights=False)

    return out_padded[:B, :out_dim].astype(jnp.float32)


def init_params(key, input_dim, output_dim, hidden=HIDDEN):
    """Deterministic synthetic parameters (PyTorch Linear init, stored [in, out], 1-D bias)."""
    dims = [input_dim, hidden, hidden, hidden, hidden, output_dim]
    params = []
    for i in range(5):
        key, kw, kb = jax.random.split(key, 3)
        fan_in, fan_out = dims[i], dims[i + 1]
        bound = 1.0 / jnp.sqrt(fan_in)
        w = jax.random.uniform(kw, (fan_in, fan_out), jnp.float32, -bound, bound)
        b = jax.random.uniform(kb, (fan_out,), jnp.float32, -bound, bound)
        params.append((w, b))
    return params


def reference_forward(x, params):
    """Pure-JAX fp32 reference for correctness check."""
    h = x.reshape(x.shape[0], -1).astype(jnp.float32)
    for i, (w, b) in enumerate(params):
        h = h @ w + b.reshape(1, -1)
        if i < 4:
            h = jnp.maximum(h, 0.0)
    return jax.nn.sigmoid(h)


if __name__ == "__main__":
    key = jax.random.PRNGKey(0)
    k_x, k_p = jax.random.split(key)

    # Small shapes: batch=8, x: [8, 4, 8] -> flatten -> input_dim=32, output_dim=16
    B, C, W = 8, 4, 8
    input_dim, output_dim = C * W, 16

    x = jax.random.normal(k_x, (B, C, W), jnp.float32)
    params = init_params(k_p, input_dim, output_dim)

    out = neural_network_max_util(x, params)
    out = jax.block_until_ready(out)

    ref = reference_forward(x, params)
    assert out.shape == (B, output_dim)
    # bf16 MXU operands + bf16 output writeback -> looser tolerance than pure fp32.
    assert jnp.allclose(out, ref, atol=5e-2, rtol=5e-2), "mismatch vs reference"

    print("KERNEL_OK")
</pallas_src>

<mosaic_0001>
module attributes {stable_mosaic.version = 11 : i64} {
  func.func @mlp_kernel(%arg0: i32, %arg1: memref<16x128xbf16, #tpu.memory_space<vmem>>, %arg2: memref<128x128xbf16, #tpu.memory_space<vmem>>, %arg3: memref<1x128xf32, #tpu.memory_space<vmem>>, %arg4: memref<128x128xbf16, #tpu.memory_space<vmem>>, %arg5: memref<1x128xf32, #tpu.memory_space<vmem>>, %arg6: memref<128x128xbf16, #tpu.memory_space<vmem>>, %arg7: memref<1x128xf32, #tpu.memory_space<vmem>>, %arg8: memref<128x128xbf16, #tpu.memory_space<vmem>>, %arg9: memref<1x128xf32, #tpu.memory_space<vmem>>, %arg10: memref<128x128xbf16, #tpu.memory_space<vmem>>, %arg11: memref<1x128xf32, #tpu.memory_space<vmem>>, %arg12: memref<16x128xbf16, #tpu.memory_space<vmem>>) attributes {dimension_semantics = [#tpu.dimension_semantics<parallel>], iteration_bounds = array<i64: 1>, scalar_prefetch = 0 : i64, scratch_operands = 0 : i64, tpu.core_type = #tpu.core_type<tc>, window_params = [{transform_indices = @transform_0, window_bounds = array<i64: 16, 128>}, {pipeline_mode = #tpu.pipeline_mode<synchronous>, transform_indices = @transform_1, window_bounds = array<i64: 128, 128>}, {pipeline_mode = #tpu.pipeline_mode<synchronous>, transform_indices = @transform_2, window_bounds = array<i64: 1, 128>}, {pipeline_mode = #tpu.pipeline_mode<synchronous>, transform_indices = @transform_3, window_bounds = array<i64: 128, 128>}, {pipeline_mode = #tpu.pipeline_mode<synchronous>, transform_indices = @transform_4, window_bounds = array<i64: 1, 128>}, {pipeline_mode = #tpu.pipeline_mode<synchronous>, transform_indices = @transform_5, window_bounds = array<i64: 128, 128>}, {pipeline_mode = #tpu.pipeline_mode<synchronous>, transform_indices = @transform_6, window_bounds = array<i64: 1, 128>}, {pipeline_mode = #tpu.pipeline_mode<synchronous>, transform_indices = @transform_7, window_bounds = array<i64: 128, 128>}, {pipeline_mode = #tpu.pipeline_mode<synchronous>, transform_indices = @transform_8, window_bounds = array<i64: 1, 128>}, {pipeline_mode = #tpu.pipeline_mode<synchronous>, transform_indices = @transform_9, window_bounds = array<i64: 128, 128>}, {pipeline_mode = #tpu.pipeline_mode<synchronous>, transform_indices = @transform_10, window_bounds = array<i64: 1, 128>}, {transform_indices = @transform_11, window_bounds = array<i64: 16, 128>}]} {
    %c0 = arith.constant 0 : index
    %c0_0 = arith.constant 0 : index
    %0 = vector.load %arg1[%c0, %c0_0] : memref<16x128xbf16, #tpu.memory_space<vmem>>, vector<16x128xbf16>
    %c0_1 = arith.constant 0 : index
    %c0_2 = arith.constant 0 : index
    %1 = vector.load %arg2[%c0_1, %c0_2] : memref<128x128xbf16, #tpu.memory_space<vmem>>, vector<128x128xbf16>
    %cst = arith.constant dense<0.000000e+00> : vector<16x128xf32>
    %2 = tpu.matmul %0, %1, %cst {dimension_numbers = #tpu.dot_dimension_numbers<[1], [0], [0], [1], [0, 0, 1, 1], [], []>} : vector<16x128xbf16>, vector<128x128xbf16>, vector<16x128xf32> -> vector<16x128xf32>
    %c0_3 = arith.constant 0 : index
    %c0_4 = arith.constant 0 : index
    %3 = vector.load %arg3[%c0_3, %c0_4] : memref<1x128xf32, #tpu.memory_space<vmem>>, vector<1x128xf32>
    %4 = vector.broadcast %3 : vector<1x128xf32> to vector<16x128xf32>
    %5 = arith.addf %2, %4 : vector<16x128xf32>
    %cst_5 = arith.constant 0.000000e+00 : f32
    %6 = vector.broadcast %cst_5 : f32 to vector<16x128xf32>
    %7 = arith.maximumf %5, %6 : vector<16x128xf32>
    %8 = arith.truncf %7 : vector<16x128xf32> to vector<16x128xbf16>
    %c0_6 = arith.constant 0 : index
    %c0_7 = arith.constant 0 : index
    %9 = vector.load %arg4[%c0_6, %c0_7] : memref<128x128xbf16, #tpu.memory_space<vmem>>, vector<128x128xbf16>
    %cst_8 = arith.constant dense<0.000000e+00> : vector<16x128xf32>
    %10 = tpu.matmul %8, %9, %cst_8 {dimension_numbers = #tpu.dot_dimension_numbers<[1], [0], [0], [1], [0, 0, 1, 1], [], []>} : vector<16x128xbf16>, vector<128x128xbf16>, vector<16x128xf32> -> vector<16x128xf32>
    %c0_9 = arith.constant 0 : index
    %c0_10 = arith.constant 0 : index
    %11 = vector.load %arg5[%c0_9, %c0_10] : memref<1x128xf32, #tpu.memory_space<vmem>>, vector<1x128xf32>
    %12 = vector.broadcast %11 : vector<1x128xf32> to vector<16x128xf32>
    %13 = arith.addf %10, %12 : vector<16x128xf32>
    %cst_11 = arith.constant 0.000000e+00 : f32
    %14 = vector.broadcast %cst_11 : f32 to vector<16x128xf32>
    %15 = arith.maximumf %13, %14 : vector<16x128xf32>
    %16 = arith.truncf %15 : vector<16x128xf32> to vector<16x128xbf16>
    %c0_12 = arith.constant 0 : index
    %c0_13 = arith.constant 0 : index
    %17 = vector.load %arg6[%c0_12, %c0_13] : memref<128x128xbf16, #tpu.memory_space<vmem>>, vector<128x128xbf16>
    %cst_14 = arith.constant dense<0.000000e+00> : vector<16x128xf32>
    %18 = tpu.matmul %16, %17, %cst_14 {dimension_numbers = #tpu.dot_dimension_numbers<[1], [0], [0], [1], [0, 0, 1, 1], [], []>} : vector<16x128xbf16>, vector<128x128xbf16>, vector<16x128xf32> -> vector<16x128xf32>
    %c0_15 = arith.constant 0 : index
    %c0_16 = arith.constant 0 : index
    %19 = vector.load %arg7[%c0_15, %c0_16] : memref<1x128xf32, #tpu.memory_space<vmem>>, vector<1x128xf32>
    %20 = vector.broadcast %19 : vector<1x128xf32> to vector<16x128xf32>
    %21 = arith.addf %18, %20 : vector<16x128xf32>
    %cst_17 = arith.constant 0.000000e+00 : f32
    %22 = vector.broadcast %cst_17 : f32 to vector<16x128xf32>
    %23 = arith.maximumf %21, %22 : vector<16x128xf32>
    %24 = arith.truncf %23 : vector<16x128xf32> to vector<16x128xbf16>
    %c0_18 = arith.constant 0 : index
    %c0_19 = arith.constant 0 : index
    %25 = vector.load %arg8[%c0_18, %c0_19] : memref<128x128xbf16, #tpu.memory_space<vmem>>, vector<128x128xbf16>
    %cst_20 = arith.constant dense<0.000000e+00> : vector<16x128xf32>
    %26 = tpu.matmul %24, %25, %cst_20 {dimension_numbers = #tpu.dot_dimension_numbers<[1], [0], [0], [1], [0, 0, 1, 1], [], []>} : vector<16x128xbf16>, vector<128x128xbf16>, vector<16x128xf32> -> vector<16x128xf32>
    %c0_21 = arith.constant 0 : index
    %c0_22 = arith.constant 0 : index
    %27 = vector.load %arg9[%c0_21, %c0_22] : memref<1x128xf32, #tpu.memory_space<vmem>>, vector<1x128xf32>
    %28 = vector.broadcast %27 : vector<1x128xf32> to vector<16x128xf32>
    %29 = arith.addf %26, %28 : vector<16x128xf32>
    %cst_23 = arith.constant 0.000000e+00 : f32
    %30 = vector.broadcast %cst_23 : f32 to vector<16x128xf32>
    %31 = arith.maximumf %29, %30 : vector<16x128xf32>
    %32 = arith.truncf %31 : vector<16x128xf32> to vector<16x128xbf16>
    %c0_24 = arith.constant 0 : index
    %c0_25 = arith.constant 0 : index
    %33 = vector.load %arg10[%c0_24, %c0_25] : memref<128x128xbf16, #tpu.memory_space<vmem>>, vector<128x128xbf16>
    %cst_26 = arith.constant dense<0.000000e+00> : vector<16x128xf32>
    %34 = tpu.matmul %32, %33, %cst_26 {dimension_numbers = #tpu.dot_dimension_numbers<[1], [0], [0], [1], [0, 0, 1, 1], [], []>} : vector<16x128xbf16>, vector<128x128xbf16>, vector<16x128xf32> -> vector<16x128xf32>
    %c0_27 = arith.constant 0 : index
    %c0_28 = arith.constant 0 : index
    %35 = vector.load %arg11[%c0_27, %c0_28] : memref<1x128xf32, #tpu.memory_space<vmem>>, vector<1x128xf32>
    %36 = vector.broadcast %35 : vector<1x128xf32> to vector<16x128xf32>
    %37 = arith.addf %34, %36 : vector<16x128xf32>
    %cst_29 = arith.constant 5.000000e-01 : f32
    %38 = vector.broadcast %cst_29 : f32 to vector<16x128xf32>
    %39 = arith.mulf %38, %37 : vector<16x128xf32>
    %40 = math.tanh %39 : vector<16x128xf32>
    %cst_30 = arith.constant 1.000000e+00 : f32
    %41 = vector.broadcast %cst_30 : f32 to vector<16x128xf32>
    %42 = arith.addf %40, %41 : vector<16x128xf32>
    %cst_31 = arith.constant 5.000000e-01 : f32
    %43 = vector.broadcast %cst_31 : f32 to vector<16x128xf32>
    %44 = arith.mulf %43, %42 : vector<16x128xf32>
    %45 = arith.truncf %44 : vector<16x128xf32> to vector<16x128xbf16>
    %c0_32 = arith.constant 0 : index
    %c0_33 = arith.constant 0 : index
    %46 = vector.load %arg12[%c0_32, %c0_33] : memref<16x128xbf16, #tpu.memory_space<vmem>>, vector<16x128xbf16>
    tpu.vector_store %arg12[%c0_32, %c0_33], %45 {strides = array<i32>} : memref<16x128xbf16, #tpu.memory_space<vmem>>, vector<16x128xbf16>,
    return
  }
  func.func @transform_0(%arg0: i32) -> (i32, i32) {
    %c0_i32 = arith.constant 0 : i32
    %c0_i32_0 = arith.constant 0 : i32
    return %arg0, %c0_i32 : i32, i32
  }
  func.func @transform_1(%arg0: i32) -> (i32, i32) {
    %c0_i32 = arith.constant 0 : i32
    %c0_i32_0 = arith.constant 0 : i32
    %c0_i32_1 = arith.constant 0 : i32
    return %c0_i32, %c0_i32_0 : i32, i32
  }
  func.func @transform_2(%arg0: i32) -> (i32, i32) {
    %c0_i32 = arith.constant 0 : i32
    %c0_i32_0 = arith.constant 0 : i32
    %c0_i32_1 = arith.constant 0 : i32
    return %c0_i32, %c0_i32_0 : i32, i32
  }
  func.func @transform_3(%arg0: i32) -> (i32, i32) {
    %c0_i32 = arith.constant 0 : i32
    %c0_i32_0 = arith.constant 0 : i32
    %c0_i32_1 = arith.constant 0 : i32
    return %c0_i32, %c0_i32_0 : i32, i32
  }
  func.func @transform_4(%arg0: i32) -> (i32, i32) {
    %c0_i32 = arith.constant 0 : i32
    %c0_i32_0 = arith.constant 0 : i32
    %c0_i32_1 = arith.constant 0 : i32
    return %c0_i32, %c0_i32_0 : i32, i32
  }
  func.func @transform_5(%arg0: i32) -> (i32, i32) {
    %c0_i32 = arith.constant 0 : i32
    %c0_i32_0 = arith.constant 0 : i32
    %c0_i32_1 = arith.constant 0 : i32
    return %c0_i32, %c0_i32_0 : i32, i32
  }
  func.func @transform_6(%arg0: i32) -> (i32, i32) {
    %c0_i32 = arith.constant 0 : i32
    %c0_i32_0 = arith.constant 0 : i32
    %c0_i32_1 = arith.constant 0 : i32
    return %c0_i32, %c0_i32_0 : i32, i32
  }
  func.func @transform_7(%arg0: i32) -> (i32, i32) {
    %c0_i32 = arith.constant 0 : i32
    %c0_i32_0 = arith.constant 0 : i32
    %c0_i32_1 = arith.constant 0 : i32
    return %c0_i32, %c0_i32_0 : i32, i32
  }
  func.func @transform_8(%arg0: i32) -> (i32, i32) {
    %c0_i32 = arith.constant 0 : i32
    %c0_i32_0 = arith.constant 0 : i32
    %c0_i32_1 = arith.constant 0 : i32
    return %c0_i32, %c0_i32_0 : i32, i32
  }
  func.func @transform_9(%arg0: i32) -> (i32, i32) {
    %c0_i32 = arith.constant 0 : i32
    %c0_i32_0 = arith.constant 0 : i32
    %c0_i32_1 = arith.constant 0 : i32
    return %c0_i32, %c0_i32_0 : i32, i32
  }
  func.func @transform_10(%arg0: i32) -> (i32, i32) {
    %c0_i32 = arith.constant 0 : i32
    %c0_i32_0 = arith.constant 0 : i32
    %c0_i32_1 = arith.constant 0 : i32
    return %c0_i32, %c0_i32_0 : i32, i32
  }
  func.func @transform_11(%arg0: i32) -> (i32, i32) {
    %c0_i32 = arith.constant 0 : i32
    %c0_i32_0 = arith.constant 0 : i32
    return %arg0, %c0_i32 : i32, i32
  }
}

module attributes {stable_mosaic.version = 11 : i64} {
  func.func @mlp_kernel(%arg0: i32, %arg1: memref<16x128xbf16, #tpu.memory_space<vmem>>, %arg2: memref<128x128xbf16, #tpu.memory_space<vmem>>, %arg3: memref<1x128xf32, #tpu.memory_space<vmem>>, %arg4: memref<128x128xbf16, #tpu.memory_space<vmem>>, %arg5: memref<1x128xf32, #tpu.memory_space<vmem>>, %arg6: memref<128x128xbf16, #tpu.memory_space<vmem>>, %arg7: memref<1x128xf32, #tpu.memory_space<vmem>>, %arg8: memref<128x128xbf16, #tpu.memory_space<vmem>>, %arg9: memref<1x128xf32, #tpu.memory_space<vmem>>, %arg10: memref<128x128xbf16, #tpu.memory_space<vmem>>, %arg11: memref<1x128xf32, #tpu.memory_space<vmem>>, %arg12: memref<16x128xbf16, #tpu.memory_space<vmem>>) attributes {dimension_semantics = [#tpu.dimension_semantics<parallel>], iteration_bounds = array<i64: 1>, scalar_prefetch = 0 : i64, scratch_operands = 0 : i64, tpu.core_type = #tpu.core_type<tc>, window_params = [{transform_indices = @transform_0, window_bounds = array<i64: 16, 128>}, {pipeline_mode = #tpu.pipeline_mode<synchronous>, transform_indices = @transform_1, window_bounds = array<i64: 128, 128>}, {pipeline_mode = #tpu.pipeline_mode<synchronous>, transform_indices = @transform_2, window_bounds = array<i64: 1, 128>}, {pipeline_mode = #tpu.pipeline_mode<synchronous>, transform_indices = @transform_3, window_bounds = array<i64: 128, 128>}, {pipeline_mode = #tpu.pipeline_mode<synchronous>, transform_indices = @transform_4, window_bounds = array<i64: 1, 128>}, {pipeline_mode = #tpu.pipeline_mode<synchronous>, transform_indices = @transform_5, window_bounds = array<i64: 128, 128>}, {pipeline_mode = #tpu.pipeline_mode<synchronous>, transform_indices = @transform_6, window_bounds = array<i64: 1, 128>}, {pipeline_mode = #tpu.pipeline_mode<synchronous>, transform_indices = @transform_7, window_bounds = array<i64: 128, 128>}, {pipeline_mode = #tpu.pipeline_mode<synchronous>, transform_indices = @transform_8, window_bounds = array<i64: 1, 128>}, {pipeline_mode = #tpu.pipeline_mode<synchronous>, transform_indices = @transform_9, window_bounds = array<i64: 128, 128>}, {pipeline_mode = #tpu.pipeline_mode<synchronous>, transform_indices = @transform_10, window_bounds = array<i64: 1, 128>}, {transform_indices = @transform_11, window_bounds = array<i64: 16, 128>}]} {
    %c0 = arith.constant 0 : index
    %c0_0 = arith.constant 0 : index
    %0 = vector.load %arg1[%c0, %c0_0] : memref<16x128xbf16, #tpu.memory_space<vmem>>, vector<16x128xbf16>
    %c0_1 = arith.constant 0 : index
    %c0_2 = arith.constant 0 : index
    %1 = vector.load %arg2[%c0_1, %c0_2] : memref<128x128xbf16, #tpu.memory_space<vmem>>, vector<128x128xbf16>
    %cst = arith.constant dense<0.000000e+00> : vector<16x128xf32>
    %2 = tpu.matmul %0, %1, %cst {dimension_numbers = #tpu.dot_dimension_numbers<[1], [0], [0], [1], [0, 0, 1, 1], [], []>} : vector<16x128xbf16>, vector<128x128xbf16>, vector<16x128xf32> -> vector<16x128xf32>
    %c0_3 = arith.constant 0 : index
    %c0_4 = arith.constant 0 : index
    %3 = vector.load %arg3[%c0_3, %c0_4] : memref<1x128xf32, #tpu.memory_space<vmem>>, vector<1x128xf32>
    %4 = vector.broadcast %3 : vector<1x128xf32> to vector<16x128xf32>
    %5 = arith.addf %2, %4 : vector<16x128xf32>
    %cst_5 = arith.constant 0.000000e+00 : f32
    %6 = vector.broadcast %cst_5 : f32 to vector<16x128xf32>
    %7 = arith.maximumf %5, %6 : vector<16x128xf32>
    %8 = arith.truncf %7 : vector<16x128xf32> to vector<16x128xbf16>
    %c0_6 = arith.constant 0 : index
    %c0_7 = arith.constant 0 : index
    %9 = vector.load %arg4[%c0_6, %c0_7] : memref<128x128xbf16, #tpu.memory_space<vmem>>, vector<128x128xbf16>
    %cst_8 = arith.constant dense<0.000000e+00> : vector<16x128xf32>
    %10 = tpu.matmul %8, %9, %cst_8 {dimension_numbers = #tpu.dot_dimension_numbers<[1], [0], [0], [1], [0, 0, 1, 1], [], []>} : vector<16x128xbf16>, vector<128x128xbf16>, vector<16x128xf32> -> vector<16x128xf32>
    %c0_9 = arith.constant 0 : index
    %c0_10 = arith.constant 0 : index
    %11 = vector.load %arg5[%c0_9, %c0_10] : memref<1x128xf32, #tpu.memory_space<vmem>>, vector<1x128xf32>
    %12 = vector.broadcast %11 : vector<1x128xf32> to vector<16x128xf32>
    %13 = arith.addf %10, %12 : vector<16x128xf32>
    %cst_11 = arith.constant 0.000000e+00 : f32
    %14 = vector.broadcast %cst_11 : f32 to vector<16x128xf32>
    %15 = arith.maximumf %13, %14 : vector<16x128xf32>
    %16 = arith.truncf %15 : vector<16x128xf32> to vector<16x128xbf16>
    %c0_12 = arith.constant 0 : index
    %c0_13 = arith.constant 0 : index
    %17 = vector.load %arg6[%c0_12, %c0_13] : memref<128x128xbf16, #tpu.memory_space<vmem>>, vector<128x128xbf16>
    %cst_14 = arith.constant dense<0.000000e+00> : vector<16x128xf32>
    %18 = tpu.matmul %16, %17, %cst_14 {dimension_numbers = #tpu.dot_dimension_numbers<[1], [0], [0], [1], [0, 0, 1, 1], [], []>} : vector<16x128xbf16>, vector<128x128xbf16>, vector<16x128xf32> -> vector<16x128xf32>
    %c0_15 = arith.constant 0 : index
    %c0_16 = arith.constant 0 : index
    %19 = vector.load %arg7[%c0_15, %c0_16] : memref<1x128xf32, #tpu.memory_space<vmem>>, vector<1x128xf32>
    %20 = vector.broadcast %19 : vector<1x128xf32> to vector<16x128xf32>
    %21 = arith.addf %18, %20 : vector<16x128xf32>
    %cst_17 = arith.constant 0.000000e+00 : f32
    %22 = vector.broadcast %cst_17 : f32 to vector<16x128xf32>
    %23 = arith.maximumf %21, %22 : vector<16x128xf32>
    %24 = arith.truncf %23 : vector<16x128xf32> to vector<16x128xbf16>
    %c0_18 = arith.constant 0 : index
    %c0_19 = arith.constant 0 : index
    %25 = vector.load %arg8[%c0_18, %c0_19] : memref<128x128xbf16, #tpu.memory_space<vmem>>, vector<128x128xbf16>
    %cst_20 = arith.constant dense<0.000000e+00> : vector<16x128xf32>
    %26 = tpu.matmul %24, %25, %cst_20 {dimension_numbers = #tpu.dot_dimension_numbers<[1], [0], [0], [1], [0, 0, 1, 1], [], []>} : vector<16x128xbf16>, vector<128x128xbf16>, vector<16x128xf32> -> vector<16x128xf32>
    %c0_21 = arith.constant 0 : index
    %c0_22 = arith.constant 0 : index
    %27 = vector.load %arg9[%c0_21, %c0_22] : memref<1x128xf32, #tpu.memory_space<vmem>>, vector<1x128xf32>
    %28 = vector.broadcast %27 : vector<1x128xf32> to vector<16x128xf32>
    %29 = arith.addf %26, %28 : vector<16x128xf32>
    %cst_23 = arith.constant 0.000000e+00 : f32
    %30 = vector.broadcast %cst_23 : f32 to vector<16x128xf32>
    %31 = arith.maximumf %29, %30 : vector<16x128xf32>
    %32 = arith.truncf %31 : vector<16x128xf32> to vector<16x128xbf16>
    %c0_24 = arith.constant 0 : index
    %c0_25 = arith.constant 0 : index
    %33 = vector.load %arg10[%c0_24, %c0_25] : memref<128x128xbf16, #tpu.memory_space<vmem>>, vector<128x128xbf16>
    %cst_26 = arith.constant dense<0.000000e+00> : vector<16x128xf32>
    %34 = tpu.matmul %32, %33, %cst_26 {dimension_numbers = #tpu.dot_dimension_numbers<[1], [0], [0], [1], [0, 0, 1, 1], [], []>} : vector<16x128xbf16>, vector<128x128xbf16>, vector<16x128xf32> -> vector<16x128xf32>
    %c0_27 = arith.constant 0 : index
    %c0_28 = arith.constant 0 : index
    %35 = vector.load %arg11[%c0_27, %c0_28] : memref<1x128xf32, #tpu.memory_space<vmem>>, vector<1x128xf32>
    %36 = vector.broadcast %35 : vector<1x128xf32> to vector<16x128xf32>
    %37 = arith.addf %34, %36 : vector<16x128xf32>
    %cst_29 = arith.constant 5.000000e-01 : f32
    %38 = vector.broadcast %cst_29 : f32 to vector<16x128xf32>
    %39 = arith.mulf %38, %37 : vector<16x128xf32>
    %40 = math.tanh %39 : vector<16x128xf32>
    %cst_30 = arith.constant 1.000000e+00 : f32
    %41 = vector.broadcast %cst_30 : f32 to vector<16x128xf32>
    %42 = arith.addf %40, %41 : vector<16x128xf32>
    %cst_31 = arith.constant 5.000000e-01 : f32
    %43 = vector.broadcast %cst_31 : f32 to vector<16x128xf32>
    %44 = arith.mulf %43, %42 : vector<16x128xf32>
    %45 = arith.truncf %44 : vector<16x128xf32> to vector<16x128xbf16>
    %c0_32 = arith.constant 0 : index
    %c0_33 = arith.constant 0 : index
    %46 = vector.load %arg12[%c0_32, %c0_33] : memref<16x128xbf16, #tpu.memory_space<vmem>>, vector<16x128xbf16>
    tpu.vector_store %arg12[%c0_32, %c0_33], %45 {strides = array<i32>} : memref<16x128xbf16, #tpu.memory_space<vmem>>, vector<16x128xbf16>,
    return
  }
  func.func @transform_0(%arg0: i32) -> (i32, i32) {
    %c0_i32 = arith.constant 0 : i32
    %c0_i32_0 = arith.constant 0 : i32
    return %arg0, %c0_i32 : i32, i32
  }
  func.func @transform_1(%arg0: i32) -> (i32, i32) {
    %c0_i32 = arith.constant 0 : i32
    %c0_i32_0 = arith.constant 0 : i32
    %c0_i32_1 = arith.constant 0 : i32
    return %c0_i32, %c0_i32_0 : i32, i32
  }
  func.func @transform_2(%arg0: i32) -> (i32, i32) {
    %c0_i32 = arith.constant 0 : i32
    %c0_i32_0 = arith.constant 0 : i32
    %c0_i32_1 = arith.constant 0 : i32
    return %c0_i32, %c0_i32_0 : i32, i32
  }
  func.func @transform_3(%arg0: i32) -> (i32, i32) {
    %c0_i32 = arith.constant 0 : i32
    %c0_i32_0 = arith.constant 0 : i32
    %c0_i32_1 = arith.constant 0 : i32
    return %c0_i32, %c0_i32_0 : i32, i32
  }
  func.func @transform_4(%arg0: i32) -> (i32, i32) {
    %c0_i32 = arith.constant 0 : i32
    %c0_i32_0 = arith.constant 0 : i32
    %c0_i32_1 = arith.constant 0 : i32
    return %c0_i32, %c0_i32_0 : i32, i32
  }
  func.func @transform_5(%arg0: i32) -> (i32, i32) {
    %c0_i32 = arith.constant 0 : i32
    %c0_i32_0 = arith.constant 0 : i32
    %c0_i32_1 = arith.constant 0 : i32
    return %c0_i32, %c0_i32_0 : i32, i32
  }
  func.func @transform_6(%arg0: i32) -> (i32, i32) {
    %c0_i32 = arith.constant 0 : i32
    %c0_i32_0 = arith.constant 0 : i32
    %c0_i32_1 = arith.constant 0 : i32
    return %c0_i32, %c0_i32_0 : i32, i32
  }
  func.func @transform_7(%arg0: i32) -> (i32, i32) {
    %c0_i32 = arith.constant 0 : i32
    %c0_i32_0 = arith.constant 0 : i32
    %c0_i32_1 = arith.constant 0 : i32
    return %c0_i32, %c0_i32_0 : i32, i32
  }
  func.func @transform_8(%arg0: i32) -> (i32, i32) {
    %c0_i32 = arith.constant 0 : i32
    %c0_i32_0 = arith.constant 0 : i32
    %c0_i32_1 = arith.constant 0 : i32
    return %c0_i32, %c0_i32_0 : i32, i32
  }
  func.func @transform_9(%arg0: i32) -> (i32, i32) {
    %c0_i32 = arith.constant 0 : i32
    %c0_i32_0 = arith.constant 0 : i32
    %c0_i32_1 = arith.constant 0 : i32
    return %c0_i32, %c0_i32_0 : i32, i32
  }
  func.func @transform_10(%arg0: i32) -> (i32, i32) {
    %c0_i32 = arith.constant 0 : i32
    %c0_i32_0 = arith.constant 0 : i32
    %c0_i32_1 = arith.constant 0 : i32
    return %c0_i32, %c0_i32_0 : i32, i32
  }
  func.func @transform_11(%arg0: i32) -> (i32, i32) {
    %c0_i32 = arith.constant 0 : i32
    %c0_i32_0 = arith.constant 0 : i32
    return %arg0, %c0_i32 : i32, i32
  }
}

</mosaic_0001>

<llo_original>
// kernel: tpu_custom_call.1
$region0: #{tpu_custom_call.1}
  #allocation0 [shape = 'u32[]', space=smem, size = 0x4, offset = 0x4, fixed_abs, tag = 'smem constant byte address 0x4 - core index']
  #allocation1 [shape = 'u32[72,128]{1,0:T(1,128)}', space=vmem, size = 0x9000, scoped, tag = 'internal scratch']
  %s0 = inlined_call_operand.hbm [shape: bf16[16,128], index: 0, kind: input, shape index: {}]
  %s1 = inlined_call_operand.hbm [shape: bf16[128,128], index: 1, kind: input, shape index: {}]
  %s2 = inlined_call_operand.vmem [shape: f32[1,128], index: 2, kind: input, shape index: {}]
  %s3 = inlined_call_operand.hbm [shape: bf16[128,128], index: 3, kind: input, shape index: {}]
  %s4 = inlined_call_operand.vmem [shape: f32[1,128], index: 4, kind: input, shape index: {}]
  %s5 = inlined_call_operand.hbm [shape: bf16[128,128], index: 5, kind: input, shape index: {}]
  %s6 = inlined_call_operand.vmem [shape: f32[1,128], index: 6, kind: input, shape index: {}]
  %s7 = inlined_call_operand.hbm [shape: bf16[128,128], index: 7, kind: input, shape index: {}]
  %s8 = inlined_call_operand.vmem [shape: f32[1,128], index: 8, kind: input, shape index: {}]
  %s9 = inlined_call_operand.hbm [shape: bf16[128,128], index: 9, kind: input, shape index: {}]
  %s10 = inlined_call_operand.vmem [shape: f32[1,128], index: 10, kind: input, shape index: {}]
  %s11 = inlined_call_operand.hbm [shape: bf16[16,128], index: 11, kind: output, shape index: {}]
  %s12 = sld [smem:[#allocation0]]
  $region78: #{tpu_custom_call.1} parent=0
    _
  %s14 = ssub.s32 1, %s12
  %s15 = scalar_select 0, %s14, %s12
  $region1: #{tpu_custom_call.1} parent=0
    #allocation2 [shape = 'u8[4096]{0}', space=vmem, size = 0x1000, scoped, tag = 'input window, operand 0, single buffered']
    #allocation3 [shape = 's32[1]{0}', space=sflag, size = 0x4, scoped, tag = 'scoped memory for tpu_custom_call.1']
    #allocation4 [shape = 's32[1]{0}', space=sflag, size = 0x4, scoped, tag = 'scoped memory for tpu_custom_call.1']
    #allocation5 [shape = 'u8[32768]{0}', space=vmem, size = 0x8000, scoped, tag = 'input window, operand 1, single buffered']
    #allocation6 [shape = 's32[1]{0}', space=sflag, size = 0x4, scoped, tag = 'scoped memory for tpu_custom_call.1']
    #allocation7 [shape = 'u8[32768]{0}', space=vmem, size = 0x8000, scoped, tag = 'input window, operand 3, single buffered']
    #allocation8 [shape = 'u8[32768]{0}', space=vmem, size = 0x8000, scoped, tag = 'input window, operand 5, single buffered']
    #allocation9 [shape = 's32[1]{0}', space=sflag, size = 0x4, scoped, tag = 'scoped memory for tpu_custom_call.1']
    #allocation10 [shape = 'u8[32768]{0}', space=vmem, size = 0x8000, scoped, tag = 'input window, operand 7, single buffered']
    #allocation11 [shape = 'u8[32768]{0}', space=vmem, size = 0x8000, scoped, tag = 'input window, operand 9, single buffered']
    #allocation12 [shape = 's32[1]{0}', space=sflag, size = 0x4, scoped, tag = 'scoped memory for tpu_custom_call.1']
    #allocation13 [shape = 'u8[4096]{0}', space=vmem, size = 0x1000, scoped, tag = 'output window, operand 0, single buffered']
    %16 = vsyncpa [#allocation3], 0
    %17 = vsyncpa [#allocation6], 0
    %18 = vsyncpa [#allocation9], 0
    %19 = vsyncpa [#allocation12], 0
    %20 = vsyncpa [#allocation4], 0
    // Predicated region
    $region2: #{tpu_custom_call.1} parent=1 // pred_check
      _
    $region3: #{tpu_custom_call.1} parent=1 // pred_check_branch
      %22 = sbr.rel (0) target = $region5
    $region4: #{tpu_custom_call.1} parent=1 // pred_region
      %24 = vsyncadd [#allocation3], 0
      %s25 = sshll.u32 %s0, 4
      %s26 = int_to_ptr.hbm [resolvable:$true] %s25
      %s27 = sshll.u32 [#allocation2], 4
      %s28 = int_to_ptr.vmem [resolvable:$true] %s27
      %33 = dma.hbm_to_vmem [thread:$0]  %s26, 128, %s28, [#allocation3], 64, 64, 4
    $region5: #{tpu_custom_call.1} parent=1 // pred_fallthru
      _
    // Predicated region
    $region6: #{tpu_custom_call.1} parent=1 // pred_check
      _
    $region7: #{tpu_custom_call.1} parent=1 // pred_check_branch
      %35 = sbr.rel (0) target = $region9
    $region8: #{tpu_custom_call.1} parent=1 // pred_region
      %37 = vsyncadd [#allocation6], 0
      %s38 = sshll.u32 %s1, 4
      %s39 = int_to_ptr.hbm [resolvable:$true] %s38
      %s40 = sshll.u32 [#allocation5], 4
      %s41 = int_to_ptr.vmem [resolvable:$true] %s40
      %46 = dma.hbm_to_vmem [thread:$0]  %s39, 1024, %s41, [#allocation6], 64, 64, 4
    $region9: #{tpu_custom_call.1} parent=1 // pred_fallthru
      _
    // Predicated region
    $region10: #{tpu_custom_call.1} parent=1 // pred_check
      _
    $region11: #{tpu_custom_call.1} parent=1 // pred_check_branch
      %48 = sbr.rel (0) target = $region13
    $region12: #{tpu_custom_call.1} parent=1 // pred_region
      _
    $region13: #{tpu_custom_call.1} parent=1 // pred_fallthru
      _
    // Predicated region
    $region14: #{tpu_custom_call.1} parent=1 // pred_check
      _
    $region15: #{tpu_custom_call.1} parent=1 // pred_check_branch
      %50 = sbr.rel (0) target = $region17
    $region16: #{tpu_custom_call.1} parent=1 // pred_region
      %52 = vsyncadd [#allocation6], 0
      %s53 = sshll.u32 %s3, 4
      %s54 = int_to_ptr.hbm [resolvable:$true] %s53
      %s55 = sshll.u32 [#allocation7], 4
      %s56 = int_to_ptr.vmem [resolvable:$true] %s55
      %61 = dma.hbm_to_vmem [thread:$0]  %s54, 1024, %s56, [#allocation6], 64, 64, 4
    $region17: #{tpu_custom_call.1} parent=1 // pred_fallthru
      _
    // Predicated region
    $region18: #{tpu_custom_call.1} parent=1 // pred_check
      _
    $region19: #{tpu_custom_call.1} parent=1 // pred_check_branch
      %63 = sbr.rel (0) target = $region21
    $region20: #{tpu_custom_call.1} parent=1 // pred_region
      _
    $region21: #{tpu_custom_call.1} parent=1 // pred_fallthru
      _
    // Predicated region
    $region22: #{tpu_custom_call.1} parent=1 // pred_check
      _
    $region23: #{tpu_custom_call.1} parent=1 // pred_check_branch
      %65 = sbr.rel (0) target = $region25
    $region24: #{tpu_custom_call.1} parent=1 // pred_region
      %67 = vsyncadd [#allocation9], 0
      %s68 = sshll.u32 %s5, 4
      %s69 = int_to_ptr.hbm [resolvable:$true] %s68
      %s70 = sshll.u32 [#allocation8], 4
      %s71 = int_to_ptr.vmem [resolvable:$true] %s70
      %76 = dma.hbm_to_vmem [thread:$0]  %s69, 1024, %s71, [#allocation9], 64, 64, 4
    $region25: #{tpu_custom_call.1} parent=1 // pred_fallthru
      _
    // Predicated region
    $region26: #{tpu_custom_call.1} parent=1 // pred_check
      _
    $region27: #{tpu_custom_call.1} parent=1 // pred_check_branch
      %78 = sbr.rel (0) target = $region29
    $region28: #{tpu_custom_call.1} parent=1 // pred_region
      _
    $region29: #{tpu_custom_call.1} parent=1 // pred_fallthru
      _
    // Predicated region
    $region30: #{tpu_custom_call.1} parent=1 // pred_check
      _
    $region31: #{tpu_custom_call.1} parent=1 // pred_check_branch
      %80 = sbr.rel (0) target = $region33
    $region32: #{tpu_custom_call.1} parent=1 // pred_region
      %82 = vsyncadd [#allocation9], 0
      %s83 = sshll.u32 %s7, 4
      %s84 = int_to_ptr.hbm [resolvable:$true] %s83
      %s85 = sshll.u32 [#allocation10], 4
      %s86 = int_to_ptr.vmem [resolvable:$true] %s85
      %91 = dma.hbm_to_vmem [thread:$0]  %s84, 1024, %s86, [#allocation9], 64, 64, 4
    $region33: #{tpu_custom_call.1} parent=1 // pred_fallthru
      _
    // Predicated region
    $region34: #{tpu_custom_call.1} parent=1 // pred_check
      _
    $region35: #{tpu_custom_call.1} parent=1 // pred_check_branch
      %93 = sbr.rel (0) target = $region37
    $region36: #{tpu_custom_call.1} parent=1 // pred_region
      _
    $region37: #{tpu_custom_call.1} parent=1 // pred_fallthru
      _
    // Predicated region
    $region38: #{tpu_custom_call.1} parent=1 // pred_check
      _
    $region39: #{tpu_custom_call.1} parent=1 // pred_check_branch
      %95 = sbr.rel (0) target = $region41
    $region40: #{tpu_custom_call.1} parent=1 // pred_region
      %97 = vsyncadd [#allocation12], 0
      %s98 = sshll.u32 %s9, 4
      %s99 = int_to_ptr.hbm [resolvable:$true] %s98
      %s100 = sshll.u32 [#allocation11], 4
      %s101 = int_to_ptr.vmem [resolvable:$true] %s100
      %106 = dma.hbm_to_vmem [thread:$0]  %s99, 1024, %s101, [#allocation12], 64, 64, 4
    $region41: #{tpu_custom_call.1} parent=1 // pred_fallthru
      _
    // Predicated region
    $region42: #{tpu_custom_call.1} parent=1 // pred_check
      _
    $region43: #{tpu_custom_call.1} parent=1 // pred_check_branch
      %108 = sbr.rel (0) target = $region45
    $region44: #{tpu_custom_call.1} parent=1 // pred_region
      _
    $region45: #{tpu_custom_call.1} parent=1 // pred_fallthru
      _
    // Predicated region
    $region46: #{tpu_custom_call.1} parent=1 // pred_check
      _
    $region47: #{tpu_custom_call.1} parent=1 // pred_check_branch
      %110 = sbr.rel (0) target = $region49
    $region48: #{tpu_custom_call.1} parent=1 // pred_region
      %112 = dma.done [#allocation3], 128
    $region49: #{tpu_custom_call.1} parent=1 // pred_fallthru
      _
    // Predicated region
    $region50: #{tpu_custom_call.1} parent=1 // pred_check
      _
    $region51: #{tpu_custom_call.1} parent=1 // pred_check_branch
      %114 = sbr.rel (0) target = $region53
    $region52: #{tpu_custom_call.1} parent=1 // pred_region
      %116 = dma.done [#allocation6], 1024
    $region53: #{tpu_custom_call.1} parent=1 // pred_fallthru
      _
    // Predicated region
    $region54: #{tpu_custom_call.1} parent=1 // pred_check
      _
    $region55: #{tpu_custom_call.1} parent=1 // pred_check_branch
      %118 = sbr.rel (0) target = $region57
    $region56: #{tpu_custom_call.1} parent=1 // pred_region
      %120 = dma.done [#allocation6], 1024
    $region57: #{tpu_custom_call.1} parent=1 // pred_fallthru
      _
    // Predicated region
    $region58: #{tpu_custom_call.1} parent=1 // pred_check
      _
    $region59: #{tpu_custom_call.1} parent=1 // pred_check_branch
      %122 = sbr.rel (0) target = $region61
    $region60: #{tpu_custom_call.1} parent=1 // pred_region
      %124 = dma.done [#allocation9], 1024
    $region61: #{tpu_custom_call.1} parent=1 // pred_fallthru
      _
    // Predicated region
    $region62: #{tpu_custom_call.1} parent=1 // pred_check
      _
    $region63: #{tpu_custom_call.1} parent=1 // pred_check_branch
      %126 = sbr.rel (0) target = $region65
    $region64: #{tpu_custom_call.1} parent=1 // pred_region
      %128 = dma.done [#allocation9], 1024
    $region65: #{tpu_custom_call.1} parent=1 // pred_fallthru
      _
    // Predicated region
    $region66: #{tpu_custom_call.1} parent=1 // pred_check
      _
    $region67: #{tpu_custom_call.1} parent=1 // pred_check_branch
      %130 = sbr.rel (0) target = $region69
    $region68: #{tpu_custom_call.1} parent=1 // pred_region
      %132 = dma.done [#allocation12], 1024
    $region69: #{tpu_custom_call.1} parent=1 // pred_fallthru
      _
    %v133 = vld [vmem:[#allocation2] sm:$0xf]
    %v134 = vld [vmem:[#allocation2 + $0x4] sm:$0xf]
    %v135 = vld [vmem:[#allocation5] sm:$0xf]
    %v136 = vld [vmem:[#allocation5 + $0x4] sm:$0xf]
    %v137 = vld [vmem:[#allocation5 + $0x8] sm:$0xf]
    %v138 = vld [vmem:[#allocation5 + $0xc] sm:$0xf]
    %v139 = vld [vmem:[#allocation5 + $0x10] sm:$0xf]
    %v140 = vld [vmem:[#allocation5 + $0x14] sm:$0xf]
    %v141 = vld [vmem:[#allocation5 + $0x18] sm:$0xf]
    %v142 = vld [vmem:[#allocation5 + $0x1c] sm:$0xf]
    %v143 = vld [vmem:[#allocation5 + $0x20] sm:$0xf]
    %v144 = vld [vmem:[#allocation5 + $0x24] sm:$0xf]
    %v145 = vld [vmem:[#allocation5 + $0x28] sm:$0xf]
    %v146 = vld [vmem:[#allocation5 + $0x2c] sm:$0xf]
    %v147 = vld [vmem:[#allocation5 + $0x30] sm:$0xf]
    %v148 = vld [vmem:[#allocation5 + $0x34] sm:$0xf]
    %v149 = vld [vmem:[#allocation5 + $0x38] sm:$0xf]
    %v150 = vld [vmem:[#allocation5 + $0x3c] sm:$0xf]
    %v151 = vld [vmem:[%s2] sm:$0x1]
    %v153 = vperm.slane %v151, 0
    %v157 = vunpack.c.l.b16 %v133
    %v158 = vunpack.c.l.b16 %v134
    %v159 = vpack.c.b16 %v158, %v157
    %v177 = vunpack.c.l.b16 %v135
    %v178 = vunpack.c.l.b16 %v136
    %v179 = vunpack.c.l.b16 %v137
    %v180 = vunpack.c.l.b16 %v138
    %v181 = vunpack.c.l.b16 %v139
    %v182 = vunpack.c.l.b16 %v140
    %v183 = vunpack.c.l.b16 %v141
    %v184 = vunpack.c.l.b16 %v142
    %v185 = vunpack.c.l.b16 %v143
    %v186 = vunpack.c.l.b16 %v144
    %v187 = vunpack.c.l.b16 %v145
    %v188 = vunpack.c.l.b16 %v146
    %v189 = vunpack.c.l.b16 %v147
    %v190 = vunpack.c.l.b16 %v148
    %v191 = vunpack.c.l.b16 %v149
    %v192 = vunpack.c.l.b16 %v150
    %v193 = vpack.c.b16 %v178, %v177
    %v194 = vpack.c.b16 %v180, %v179
    %v195 = vpack.c.b16 %v182, %v181
    %v196 = vpack.c.b16 %v184, %v183
    %v197 = vpack.c.b16 %v186, %v185
    %v198 = vpack.c.b16 %v188, %v187
    %v199 = vpack.c.b16 %v190, %v189
    %v200 = vpack.c.b16 %v192, %v191
    %209 = vmatpush.bf16.msra.mxu0 %v200
    %210 = vmatpush.bf16.msra.mxu0 %v199
    %211 = vmatpush.bf16.msra.mxu0 %v198
    %212 = vmatpush.bf16.msra.mxu0 %v197
    %213 = vmatpush.bf16.msra.mxu0 %v196
    %214 = vmatpush.bf16.msra.mxu0 %v195
    %215 = vmatpush.bf16.msra.mxu0 %v194
    %216 = vmatpush.bf16.msra.mxu0 %v193
    %217 = vmatmul.bf16.gmra.mxu0 %v159
    %v218 = vpop.f32.mrf.mxu0
    %v219 = vadd.f32 %v153, %v218
    %v220 = vpop.f32.mrf.mxu0
    %v221 = vadd.f32 %v153, %v220
    %222 = vdwg.mxu0
    %v223 = vmax.f32 %v219, 0.0
    %v224 = vmax.f32 %v221, 0.0
    %v225 = vpack.c.bf16 %v224, %v223
    %v226 = vld [vmem:[#allocation7] sm:$0xf]
    %v227 = vld [vmem:[#allocation7 + $0x4] sm:$0xf]
    %v228 = vld [vmem:[#allocation7 + $0x8] sm:$0xf]
    %v229 = vld [vmem:[#allocation7 + $0xc] sm:$0xf]
    %v230 = vld [vmem:[#allocation7 + $0x10] sm:$0xf]
    %v231 = vld [vmem:[#allocation7 + $0x14] sm:$0xf]
    %v232 = vld [vmem:[#allocation7 + $0x18] sm:$0xf]
    %v233 = vld [vmem:[#allocation7 + $0x1c] sm:$0xf]
    %v234 = vld [vmem:[#allocation7 + $0x20] sm:$0xf]
    %v235 = vld [vmem:[#allocation7 + $0x24] sm:$0xf]
    %v236 = vld [vmem:[#allocation7 + $0x28] sm:$0xf]
    %v237 = vld [vmem:[#allocation7 + $0x2c] sm:$0xf]
    %v238 = vld [vmem:[#allocation7 + $0x30] sm:$0xf]
    %v239 = vld [vmem:[#allocation7 + $0x34] sm:$0xf]
    %v240 = vld [vmem:[#allocation7 + $0x38] sm:$0xf]
    %v241 = vld [vmem:[#allocation7 + $0x3c] sm:$0xf]
    %v242 = vld [vmem:[%s4] sm:$0x1]
    %v244 = vperm.slane %v242, 0
    %v262 = vunpack.c.l.b16 %v226
    %v263 = vunpack.c.l.b16 %v227
    %v264 = vunpack.c.l.b16 %v228
    %v265 = vunpack.c.l.b16 %v229
    %v266 = vunpack.c.l.b16 %v230
    %v267 = vunpack.c.l.b16 %v231
    %v268 = vunpack.c.l.b16 %v232
    %v269 = vunpack.c.l.b16 %v233
    %v270 = vunpack.c.l.b16 %v234
    %v271 = vunpack.c.l.b16 %v235
    %v272 = vunpack.c.l.b16 %v236
    %v273 = vunpack.c.l.b16 %v237
    %v274 = vunpack.c.l.b16 %v238
    %v275 = vunpack.c.l.b16 %v239
    %v276 = vunpack.c.l.b16 %v240
    %v277 = vunpack.c.l.b16 %v241
    %v278 = vpack.c.b16 %v263, %v262
    %v279 = vpack.c.b16 %v265, %v264
    %v280 = vpack.c.b16 %v267, %v266
    %v281 = vpack.c.b16 %v269, %v268
    %v282 = vpack.c.b16 %v271, %v270
    %v283 = vpack.c.b16 %v273, %v272
    %v284 = vpack.c.b16 %v275, %v274
    %v285 = vpack.c.b16 %v277, %v276
    %294 = vmatpush.bf16.msra.mxu0 %v285
    %295 = vmatpush.bf16.msra.mxu0 %v284
    %296 = vmatpush.bf16.msra.mxu0 %v283
    %297 = vmatpush.bf16.msra.mxu0 %v282
    %298 = vmatpush.bf16.msra.mxu0 %v281
    %299 = vmatpush.bf16.msra.mxu0 %v280
    %300 = vmatpush.bf16.msra.mxu0 %v279
    %301 = vmatpush.bf16.msra.mxu0 %v278
    %302 = vmatmul.bf16.gmra.mxu0 %v225
    %v303 = vpop.f32.mrf.mxu0
    %v304 = vadd.f32 %v244, %v303
    %v305 = vpop.f32.mrf.mxu0
    %v306 = vadd.f32 %v244, %v305
    %307 = vdwg.mxu0
    %v308 = vmax.f32 %v304, 0.0
    %v309 = vmax.f32 %v306, 0.0
    %v310 = vpack.c.bf16 %v309, %v308
    %v311 = vld [vmem:[#allocation8] sm:$0xf]
    %v312 = vld [vmem:[#allocation8 + $0x4] sm:$0xf]
    %v313 = vld [vmem:[#allocation8 + $0x8] sm:$0xf]
    %v314 = vld [vmem:[#allocation8 + $0xc] sm:$0xf]
    %v315 = vld [vmem:[#allocation8 + $0x10] sm:$0xf]
    %v316 = vld [vmem:[#allocation8 + $0x14] sm:$0xf]
    %v317 = vld [vmem:[#allocation8 + $0x18] sm:$0xf]
    %v318 = vld [vmem:[#allocation8 + $0x1c] sm:$0xf]
    %v319 = vld [vmem:[#allocation8 + $0x20] sm:$0xf]
    %v320 = vld [vmem:[#allocation8 + $0x24] sm:$0xf]
    %v321 = vld [vmem:[#allocation8 + $0x28] sm:$0xf]
    %v322 = vld [vmem:[#allocation8 + $0x2c] sm:$0xf]
    %v323 = vld [vmem:[#allocation8 + $0x30] sm:$0xf]
    %v324 = vld [vmem:[#allocation8 + $0x34] sm:$0xf]
    %v325 = vld [vmem:[#allocation8 + $0x38] sm:$0xf]
    %v326 = vld [vmem:[#allocation8 + $0x3c] sm:$0xf]
    %v327 = vld [vmem:[%s6] sm:$0x1]
    %v329 = vperm.slane %v327, 0
    %v347 = vunpack.c.l.b16 %v311
    %v348 = vunpack.c.l.b16 %v312
    %v349 = vunpack.c.l.b16 %v313
    %v350 = vunpack.c.l.b16 %v314
    %v351 = vunpack.c.l.b16 %v315
    %v352 = vunpack.c.l.b16 %v316
    %v353 = vunpack.c.l.b16 %v317
    %v354 = vunpack.c.l.b16 %v318
    %v355 = vunpack.c.l.b16 %v319
    %v356 = vunpack.c.l.b16 %v320
    %v357 = vunpack.c.l.b16 %v321
    %v358 = vunpack.c.l.b16 %v322
    %v359 = vunpack.c.l.b16 %v323
    %v360 = vunpack.c.l.b16 %v324
    %v361 = vunpack.c.l.b16 %v325
    %v362 = vunpack.c.l.b16 %v326
    %v363 = vpack.c.b16 %v348, %v347
    %v364 = vpack.c.b16 %v350, %v349
    %v365 = vpack.c.b16 %v352, %v351
    %v366 = vpack.c.b16 %v354, %v353
    %v367 = vpack.c.b16 %v356, %v355
    %v368 = vpack.c.b16 %v358, %v357
    %v369 = vpack.c.b16 %v360, %v359
    %v370 = vpack.c.b16 %v362, %v361
    %379 = vmatpush.bf16.msra.mxu0 %v370
    %380 = vmatpush.bf16.msra.mxu0 %v369
    %381 = vmatpush.bf16.msra.mxu0 %v368
    %382 = vmatpush.bf16.msra.mxu0 %v367
    %383 = vmatpush.bf16.msra.mxu0 %v366
    %384 = vmatpush.bf16.msra.mxu0 %v365
    %385 = vmatpush.bf16.msra.mxu0 %v364
    %386 = vmatpush.bf16.msra.mxu0 %v363
    %387 = vmatmul.bf16.gmra.mxu0 %v310
    %v388 = vpop.f32.mrf.mxu0
    %v389 = vadd.f32 %v329, %v388
    %v390 = vpop.f32.mrf.mxu0
    %v391 = vadd.f32 %v329, %v390
    %392 = vdwg.mxu0
    %v393 = vmax.f32 %v389, 0.0
    %v394 = vmax.f32 %v391, 0.0
    %v395 = vpack.c.bf16 %v394, %v393
    %v396 = vld [vmem:[#allocation10] sm:$0xf]
    %v397 = vld [vmem:[#allocation10 + $0x4] sm:$0xf]
    %v398 = vld [vmem:[#allocation10 + $0x8] sm:$0xf]
    %v399 = vld [vmem:[#allocation10 + $0xc] sm:$0xf]
    %v400 = vld [vmem:[#allocation10 + $0x10] sm:$0xf]
    %v401 = vld [vmem:[#allocation10 + $0x14] sm:$0xf]
    %v402 = vld [vmem:[#allocation10 + $0x18] sm:$0xf]
    %v403 = vld [vmem:[#allocation10 + $0x1c] sm:$0xf]
    %v404 = vld [vmem:[#allocation10 + $0x20] sm:$0xf]
    %v405 = vld [vmem:[#allocation10 + $0x24] sm:$0xf]
    %v406 = vld [vmem:[#allocation10 + $0x28] sm:$0xf]
    %v407 = vld [vmem:[#allocation10 + $0x2c] sm:$0xf]
    %v408 = vld [vmem:[#allocation10 + $0x30] sm:$0xf]
    %v409 = vld [vmem:[#allocation10 + $0x34] sm:$0xf]
    %v410 = vld [vmem:[#allocation10 + $0x38] sm:$0xf]
    %v411 = vld [vmem:[#allocation10 + $0x3c] sm:$0xf]
    %v412 = vld [vmem:[%s8] sm:$0x1]
    %v414 = vperm.slane %v412, 0
    %v432 = vunpack.c.l.b16 %v396
    %v433 = vunpack.c.l.b16 %v397
    %v434 = vunpack.c.l.b16 %v398
    %v435 = vunpack.c.l.b16 %v399
    %v436 = vunpack.c.l.b16 %v400
    %v437 = vunpack.c.l.b16 %v401
    %v438 = vunpack.c.l.b16 %v402
    %v439 = vunpack.c.l.b16 %v403
    %v440 = vunpack.c.l.b16 %v404
    %v441 = vunpack.c.l.b16 %v405
    %v442 = vunpack.c.l.b16 %v406
    %v443 = vunpack.c.l.b16 %v407
    %v444 = vunpack.c.l.b16 %v408
    %v445 = vunpack.c.l.b16 %v409
    %v446 = vunpack.c.l.b16 %v410
    %v447 = vunpack.c.l.b16 %v411
    %v448 = vpack.c.b16 %v433, %v432
    %v449 = vpack.c.b16 %v435, %v434
    %v450 = vpack.c.b16 %v437, %v436
    %v451 = vpack.c.b16 %v439, %v438
    %v452 = vpack.c.b16 %v441, %v440
    %v453 = vpack.c.b16 %v443, %v442
    %v454 = vpack.c.b16 %v445, %v444
    %v455 = vpack.c.b16 %v447, %v446
    %464 = vmatpush.bf16.msra.mxu0 %v455
    %465 = vmatpush.bf16.msra.mxu0 %v454
    %466 = vmatpush.bf16.msra.mxu0 %v453
    %467 = vmatpush.bf16.msra.mxu0 %v452
    %468 = vmatpush.bf16.msra.mxu0 %v451
    %469 = vmatpush.bf16.msra.mxu0 %v450
    %470 = vmatpush.bf16.msra.mxu0 %v449
    %471 = vmatpush.bf16.msra.mxu0 %v448
    %472 = vmatmul.bf16.gmra.mxu0 %v395
    %v473 = vpop.f32.mrf.mxu0
    %v474 = vadd.f32 %v414, %v473
    %v475 = vpop.f32.mrf.mxu0
    %v476 = vadd.f32 %v414, %v475
    %477 = vdwg.mxu0
    %v478 = vmax.f32 %v474, 0.0
    %v479 = vmax.f32 %v476, 0.0
    %v480 = vpack.c.bf16 %v479, %v478
    %v481 = vld [vmem:[#allocation11] sm:$0xf]
    %v482 = vld [vmem:[#allocation11 + $0x4] sm:$0xf]
    %v483 = vld [vmem:[#allocation11 + $0x8] sm:$0xf]
    %v484 = vld [vmem:[#allocation11 + $0xc] sm:$0xf]
    %v485 = vld [vmem:[#allocation11 + $0x10] sm:$0xf]
    %v486 = vld [vmem:[#allocation11 + $0x14] sm:$0xf]
    %v487 = vld [vmem:[#allocation11 + $0x18] sm:$0xf]
    %v488 = vld [vmem:[#allocation11 + $0x1c] sm:$0xf]
    %v489 = vld [vmem:[#allocation11 + $0x20] sm:$0xf]
    %v490 = vld [vmem:[#allocation11 + $0x24] sm:$0xf]
    %v491 = vld [vmem:[#allocation11 + $0x28] sm:$0xf]
    %v492 = vld [vmem:[#allocation11 + $0x2c] sm:$0xf]
    %v493 = vld [vmem:[#allocation11 + $0x30] sm:$0xf]
    %v494 = vld [vmem:[#allocation11 + $0x34] sm:$0xf]
    %v495 = vld [vmem:[#allocation11 + $0x38] sm:$0xf]
    %v496 = vld [vmem:[#allocation11 + $0x3c] sm:$0xf]
    %v497 = vld [vmem:[%s10] sm:$0x1]
    %v499 = vperm.slane %v497, 0
    %v517 = vunpack.c.l.b16 %v481
    %v518 = vunpack.c.l.b16 %v482
    %v519 = vunpack.c.l.b16 %v483
    %v520 = vunpack.c.l.b16 %v484
    %v521 = vunpack.c.l.b16 %v485
    %v522 = vunpack.c.l.b16 %v486
    %v523 = vunpack.c.l.b16 %v487
    %v524 = vunpack.c.l.b16 %v488
    %v525 = vunpack.c.l.b16 %v489
    %v526 = vunpack.c.l.b16 %v490
    %v527 = vunpack.c.l.b16 %v491
    %v528 = vunpack.c.l.b16 %v492
    %v529 = vunpack.c.l.b16 %v493
    %v530 = vunpack.c.l.b16 %v494
    %v531 = vunpack.c.l.b16 %v495
    %v532 = vunpack.c.l.b16 %v496
    %v533 = vpack.c.b16 %v518, %v517
    %v534 = vpack.c.b16 %v520, %v519
    %v535 = vpack.c.b16 %v522, %v521
    %v536 = vpack.c.b16 %v524, %v523
    %v537 = vpack.c.b16 %v526, %v525
    %v538 = vpack.c.b16 %v528, %v527
    %v539 = vpack.c.b16 %v530, %v529
    %v540 = vpack.c.b16 %v532, %v531
    %549 = vmatpush.bf16.msra.mxu0 %v540
    %550 = vmatpush.bf16.msra.mxu0 %v539
    %551 = vmatpush.bf16.msra.mxu0 %v538
    %552 = vmatpush.bf16.msra.mxu0 %v537
    %553 = vmatpush.bf16.msra.mxu0 %v536
    %554 = vmatpush.bf16.msra.mxu0 %v535
    %555 = vmatpush.bf16.msra.mxu0 %v534
    %556 = vmatpush.bf16.msra.mxu0 %v533
    %557 = vmatmul.bf16.gmra.mxu0 %v480
    %v558 = vpop.f32.mrf.mxu0
    %v559 = vadd.f32 %v499, %v558
    %v560 = vpop.f32.mrf.mxu0
    %v561 = vadd.f32 %v499, %v560
    %562 = vdwg.mxu0
    %v563 = vmul.f32 %v559, 0.5
    %v564 = vmul.f32 %v561, 0.5
    %v565 = vtanh.pop %v563
    %v566 = vtanh.pop %v564
    %v567 = vadd.f32 %v565, 1.0
    %v568 = vadd.f32 %v566, 1.0
    %v569 = vmul.f32 %v567, 0.5
    %v570 = vmul.f32 %v568, 0.5
    %v571 = vpack.c.bf16 %v569, %v569
    %v572 = vpack.c.bf16 %v570, %v570
    %573 = vst [vmem:[#allocation13] sm:$0xf] %v571
    %574 = vst [vmem:[#allocation13 + $0x4] sm:$0xf] %v572
    // Predicated region
    $region70: #{tpu_custom_call.1} parent=1 // pred_check
      _
    $region71: #{tpu_custom_call.1} parent=1 // pred_check_branch
      %576 = sbr.rel (0) target = $region73
    $region72: #{tpu_custom_call.1} parent=1 // pred_region
      %578 = vsyncadd [#allocation4], 0
      %s579 = sshll.u32 [#allocation13], 4
      %s580 = int_to_ptr.vmem [resolvable:$true] %s579
      %s581 = sshll.u32 %s11, 4
      %s582 = int_to_ptr.hbm [resolvable:$true] %s581
      %587 = dma.vmem_to_hbm [thread:$0]  %s580, 128, %s582, [#allocation4], 64, 64, 4
    $region73: #{tpu_custom_call.1} parent=1 // pred_fallthru
      _
    // Predicated region
    $region74: #{tpu_custom_call.1} parent=1 // pred_check
      _
    $region75: #{tpu_custom_call.1} parent=1 // pred_check_branch
      %589 = sbr.rel (0) target = $region77
    $region76: #{tpu_custom_call.1} parent=1 // pred_region
      %591 = dma.done [#allocation4], 128
    $region77: #{tpu_custom_call.1} parent=1 // pred_fallthru
      _
    %592 = vsyncpa [#allocation3], 1
    %593 = vsyncpa [#allocation6], 1
    %594 = vsyncpa [#allocation9], 1
    %595 = vsyncpa [#allocation12], 1
    %596 = vsyncpa [#allocation4], 1

// kernel: tpu_custom_call.1
$region0: #{tpu_custom_call.1}
  #allocation0 [shape = 'u32[]', space=smem, size = 0x4, offset = 0x4, fixed_abs, tag = 'smem constant byte address 0x4 - core index']
  #allocation1 [shape = 'u32[72,128]{1,0:T(1,128)}', space=vmem, size = 0x9000, scoped, tag = 'internal scratch']
  %s0 = inlined_call_operand.hbm [shape: bf16[16,128], index: 0, kind: input, shape index: {}]
  %s1 = inlined_call_operand.hbm [shape: bf16[128,128], index: 1, kind: input, shape index: {}]
  %s2 = inlined_call_operand.vmem [shape: f32[1,128], index: 2, kind: input, shape index: {}]
  %s3 = inlined_call_operand.hbm [shape: bf16[128,128], index: 3, kind: input, shape index: {}]
  %s4 = inlined_call_operand.vmem [shape: f32[1,128], index: 4, kind: input, shape index: {}]
  %s5 = inlined_call_operand.hbm [shape: bf16[128,128], index: 5, kind: input, shape index: {}]
  %s6 = inlined_call_operand.vmem [shape: f32[1,128], index: 6, kind: input, shape index: {}]
  %s7 = inlined_call_operand.hbm [shape: bf16[128,128], index: 7, kind: input, shape index: {}]
  %s8 = inlined_call_operand.vmem [shape: f32[1,128], index: 8, kind: input, shape index: {}]
  %s9 = inlined_call_operand.hbm [shape: bf16[128,128], index: 9, kind: input, shape index: {}]
  %s10 = inlined_call_operand.vmem [shape: f32[1,128], index: 10, kind: input, shape index: {}]
  %s11 = inlined_call_operand.hbm [shape: bf16[16,128], index: 11, kind: output, shape index: {}]
  %s12 = sld [smem:[#allocation0]]
  $region78: #{tpu_custom_call.1} parent=0
    _
  %s14 = ssub.s32 1, %s12
  %s15 = scalar_select 0, %s14, %s12
  $region1: #{tpu_custom_call.1} parent=0
    #allocation2 [shape = 'u8[4096]{0}', space=vmem, size = 0x1000, scoped, tag = 'input window, operand 0, single buffered']
    #allocation3 [shape = 's32[1]{0}', space=sflag, size = 0x4, scoped, tag = 'scoped memory for tpu_custom_call.1']
    #allocation4 [shape = 's32[1]{0}', space=sflag, size = 0x4, scoped, tag = 'scoped memory for tpu_custom_call.1']
    #allocation5 [shape = 'u8[32768]{0}', space=vmem, size = 0x8000, scoped, tag = 'input window, operand 1, single buffered']
    #allocation6 [shape = 's32[1]{0}', space=sflag, size = 0x4, scoped, tag = 'scoped memory for tpu_custom_call.1']
    #allocation7 [shape = 'u8[32768]{0}', space=vmem, size = 0x8000, scoped, tag = 'input window, operand 3, single buffered']
    #allocation8 [shape = 'u8[32768]{0}', space=vmem, size = 0x8000, scoped, tag = 'input window, operand 5, single buffered']
    #allocation9 [shape = 's32[1]{0}', space=sflag, size = 0x4, scoped, tag = 'scoped memory for tpu_custom_call.1']
    #allocation10 [shape = 'u8[32768]{0}', space=vmem, size = 0x8000, scoped, tag = 'input window, operand 7, single buffered']
    #allocation11 [shape = 'u8[32768]{0}', space=vmem, size = 0x8000, scoped, tag = 'input window, operand 9, single buffered']
    #allocation12 [shape = 's32[1]{0}', space=sflag, size = 0x4, scoped, tag = 'scoped memory for tpu_custom_call.1']
    #allocation13 [shape = 'u8[4096]{0}', space=vmem, size = 0x1000, scoped, tag = 'output window, operand 0, single buffered']
    %16 = vsyncpa [#allocation3], 0
    %17 = vsyncpa [#allocation6], 0
    %18 = vsyncpa [#allocation9], 0
    %19 = vsyncpa [#allocation12], 0
    %20 = vsyncpa [#allocation4], 0
    // Predicated region
    $region2: #{tpu_custom_call.1} parent=1 // pred_check
      _
    $region3: #{tpu_custom_call.1} parent=1 // pred_check_branch
      %22 = sbr.rel (0) target = $region5
    $region4: #{tpu_custom_call.1} parent=1 // pred_region
      %24 = vsyncadd [#allocation3], 0
      %s25 = sshll.u32 %s0, 4
      %s26 = int_to_ptr.hbm [resolvable:$true] %s25
      %s27 = sshll.u32 [#allocation2], 4
      %s28 = int_to_ptr.vmem [resolvable:$true] %s27
      %33 = dma.hbm_to_vmem [thread:$0]  %s26, 128, %s28, [#allocation3], 64, 64, 4
    $region5: #{tpu_custom_call.1} parent=1 // pred_fallthru
      _
    // Predicated region
    $region6: #{tpu_custom_call.1} parent=1 // pred_check
      _
    $region7: #{tpu_custom_call.1} parent=1 // pred_check_branch
      %35 = sbr.rel (0) target = $region9
    $region8: #{tpu_custom_call.1} parent=1 // pred_region
      %37 = vsyncadd [#allocation6], 0
      %s38 = sshll.u32 %s1, 4
      %s39 = int_to_ptr.hbm [resolvable:$true] %s38
      %s40 = sshll.u32 [#allocation5], 4
      %s41 = int_to_ptr.vmem [resolvable:$true] %s40
      %46 = dma.hbm_to_vmem [thread:$0]  %s39, 1024, %s41, [#allocation6], 64, 64, 4
    $region9: #{tpu_custom_call.1} parent=1 // pred_fallthru
      _
    // Predicated region
    $region10: #{tpu_custom_call.1} parent=1 // pred_check
      _
    $region11: #{tpu_custom_call.1} parent=1 // pred_check_branch
      %48 = sbr.rel (0) target = $region13
    $region12: #{tpu_custom_call.1} parent=1 // pred_region
      _
    $region13: #{tpu_custom_call.1} parent=1 // pred_fallthru
      _
    // Predicated region
    $region14: #{tpu_custom_call.1} parent=1 // pred_check
      _
    $region15: #{tpu_custom_call.1} parent=1 // pred_check_branch
      %50 = sbr.rel (0) target = $region17
    $region16: #{tpu_custom_call.1} parent=1 // pred_region
      %52 = vsyncadd [#allocation6], 0
      %s53 = sshll.u32 %s3, 4
      %s54 = int_to_ptr.hbm [resolvable:$true] %s53
      %s55 = sshll.u32 [#allocation7], 4
      %s56 = int_to_ptr.vmem [resolvable:$true] %s55
      %61 = dma.hbm_to_vmem [thread:$0]  %s54, 1024, %s56, [#allocation6], 64, 64, 4
    $region17: #{tpu_custom_call.1} parent=1 // pred_fallthru
      _
    // Predicated region
    $region18: #{tpu_custom_call.1} parent=1 // pred_check
      _
    $region19: #{tpu_custom_call.1} parent=1 // pred_check_branch
      %63 = sbr.rel (0) target = $region21
    $region20: #{tpu_custom_call.1} parent=1 // pred_region
      _
    $region21: #{tpu_custom_call.1} parent=1 // pred_fallthru
      _
    // Predicated region
    $region22: #{tpu_custom_call.1} parent=1 // pred_check
      _
    $region23: #{tpu_custom_call.1} parent=1 // pred_check_branch
      %65 = sbr.rel (0) target = $region25
    $region24: #{tpu_custom_call.1} parent=1 // pred_region
      %67 = vsyncadd [#allocation9], 0
      %s68 = sshll.u32 %s5, 4
      %s69 = int_to_ptr.hbm [resolvable:$true] %s68
      %s70 = sshll.u32 [#allocation8], 4
      %s71 = int_to_ptr.vmem [resolvable:$true] %s70
      %76 = dma.hbm_to_vmem [thread:$0]  %s69, 1024, %s71, [#allocation9], 64, 64, 4
    $region25: #{tpu_custom_call.1} parent=1 // pred_fallthru
      _
    // Predicated region
    $region26: #{tpu_custom_call.1} parent=1 // pred_check
      _
    $region27: #{tpu_custom_call.1} parent=1 // pred_check_branch
      %78 = sbr.rel (0) target = $region29
    $region28: #{tpu_custom_call.1} parent=1 // pred_region
      _
    $region29: #{tpu_custom_call.1} parent=1 // pred_fallthru
      _
    // Predicated region
    $region30: #{tpu_custom_call.1} parent=1 // pred_check
      _
    $region31: #{tpu_custom_call.1} parent=1 // pred_check_branch
      %80 = sbr.rel (0) target = $region33
    $region32: #{tpu_custom_call.1} parent=1 // pred_region
      %82 = vsyncadd [#allocation9], 0
      %s83 = sshll.u32 %s7, 4
      %s84 = int_to_ptr.hbm [resolvable:$true] %s83
      %s85 = sshll.u32 [#allocation10], 4
      %s86 = int_to_ptr.vmem [resolvable:$true] %s85
      %91 = dma.hbm_to_vmem [thread:$0]  %s84, 1024, %s86, [#allocation9], 64, 64, 4
    $region33: #{tpu_custom_call.1} parent=1 // pred_fallthru
      _
    // Predicated region
    $region34: #{tpu_custom_call.1} parent=1 // pred_check
      _
    $region35: #{tpu_custom_call.1} parent=1 // pred_check_branch
      %93 = sbr.rel (0) target = $region37
    $region36: #{tpu_custom_call.1} parent=1 // pred_region
      _
    $region37: #{tpu_custom_call.1} parent=1 // pred_fallthru
      _
    // Predicated region
    $region38: #{tpu_custom_call.1} parent=1 // pred_check
      _
    $region39: #{tpu_custom_call.1} parent=1 // pred_check_branch
      %95 = sbr.rel (0) target = $region41
    $region40: #{tpu_custom_call.1} parent=1 // pred_region
      %97 = vsyncadd [#allocation12], 0
      %s98 = sshll.u32 %s9, 4
      %s99 = int_to_ptr.hbm [resolvable:$true] %s98
      %s100 = sshll.u32 [#allocation11], 4
      %s101 = int_to_ptr.vmem [resolvable:$true] %s100
      %106 = dma.hbm_to_vmem [thread:$0]  %s99, 1024, %s101, [#allocation12], 64, 64, 4
    $region41: #{tpu_custom_call.1} parent=1 // pred_fallthru
      _
    // Predicated region
    $region42: #{tpu_custom_call.1} parent=1 // pred_check
      _
    $region43: #{tpu_custom_call.1} parent=1 // pred_check_branch
      %108 = sbr.rel (0) target = $region45
    $region44: #{tpu_custom_call.1} parent=1 // pred_region
      _
    $region45: #{tpu_custom_call.1} parent=1 // pred_fallthru
      _
    // Predicated region
    $region46: #{tpu_custom_call.1} parent=1 // pred_check
      _
    $region47: #{tpu_custom_call.1} parent=1 // pred_check_branch
      %110 = sbr.rel (0) target = $region49
    $region48: #{tpu_custom_call.1} parent=1 // pred_region
      %112 = dma.done [#allocation3], 128
    $region49: #{tpu_custom_call.1} parent=1 // pred_fallthru
      _
    // Predicated region
    $region50: #{tpu_custom_call.1} parent=1 // pred_check
      _
    $region51: #{tpu_custom_call.1} parent=1 // pred_check_branch
      %114 = sbr.rel (0) target = $region53
    $region52: #{tpu_custom_call.1} parent=1 // pred_region
      %116 = dma.done [#allocation6], 1024
    $region53: #{tpu_custom_call.1} parent=1 // pred_fallthru
      _
    // Predicated region
    $region54: #{tpu_custom_call.1} parent=1 // pred_check
      _
    $region55: #{tpu_custom_call.1} parent=1 // pred_check_branch
      %118 = sbr.rel (0) target = $region57
    $region56: #{tpu_custom_call.1} parent=1 // pred_region
      %120 = dma.done [#allocation6], 1024
    $region57: #{tpu_custom_call.1} parent=1 // pred_fallthru
      _
    // Predicated region
    $region58: #{tpu_custom_call.1} parent=1 // pred_check
      _
    $region59: #{tpu_custom_call.1} parent=1 // pred_check_branch
      %122 = sbr.rel (0) target = $region61
    $region60: #{tpu_custom_call.1} parent=1 // pred_region
      %124 = dma.done [#allocation9], 1024
    $region61: #{tpu_custom_call.1} parent=1 // pred_fallthru
      _
    // Predicated region
    $region62: #{tpu_custom_call.1} parent=1 // pred_check
      _
    $region63: #{tpu_custom_call.1} parent=1 // pred_check_branch
      %126 = sbr.rel (0) target = $region65
    $region64: #{tpu_custom_call.1} parent=1 // pred_region
      %128 = dma.done [#allocation9], 1024
    $region65: #{tpu_custom_call.1} parent=1 // pred_fallthru
      _
    // Predicated region
    $region66: #{tpu_custom_call.1} parent=1 // pred_check
      _
    $region67: #{tpu_custom_call.1} parent=1 // pred_check_branch
      %130 = sbr.rel (0) target = $region69
    $region68: #{tpu_custom_call.1} parent=1 // pred_region
      %132 = dma.done [#allocation12], 1024
    $region69: #{tpu_custom_call.1} parent=1 // pred_fallthru
      _
    %v133 = vld [vmem:[#allocation2] sm:$0xf]
    %v134 = vld [vmem:[#allocation2 + $0x4] sm:$0xf]
    %v135 = vld [vmem:[#allocation5] sm:$0xf]
    %v136 = vld [vmem:[#allocation5 + $0x4] sm:$0xf]
    %v137 = vld [vmem:[#allocation5 + $0x8] sm:$0xf]
    %v138 = vld [vmem:[#allocation5 + $0xc] sm:$0xf]
    %v139 = vld [vmem:[#allocation5 + $0x10] sm:$0xf]
    %v140 = vld [vmem:[#allocation5 + $0x14] sm:$0xf]
    %v141 = vld [vmem:[#allocation5 + $0x18] sm:$0xf]
    %v142 = vld [vmem:[#allocation5 + $0x1c] sm:$0xf]
    %v143 = vld [vmem:[#allocation5 + $0x20] sm:$0xf]
    %v144 = vld [vmem:[#allocation5 + $0x24] sm:$0xf]
    %v145 = vld [vmem:[#allocation5 + $0x28] sm:$0xf]
    %v146 = vld [vmem:[#allocation5 + $0x2c] sm:$0xf]
    %v147 = vld [vmem:[#allocation5 + $0x30] sm:$0xf]
    %v148 = vld [vmem:[#allocation5 + $0x34] sm:$0xf]
    %v149 = vld [vmem:[#allocation5 + $0x38] sm:$0xf]
    %v150 = vld [vmem:[#allocation5 + $0x3c] sm:$0xf]
    %v151 = vld [vmem:[%s2] sm:$0x1]
    %v153 = vperm.slane %v151, 0
    %v157 = vunpack.c.l.b16 %v133
    %v158 = vunpack.c.l.b16 %v134
    %v159 = vpack.c.b16 %v158, %v157
    %v177 = vunpack.c.l.b16 %v135
    %v178 = vunpack.c.l.b16 %v136
    %v179 = vunpack.c.l.b16 %v137
    %v180 = vunpack.c.l.b16 %v138
    %v181 = vunpack.c.l.b16 %v139
    %v182 = vunpack.c.l.b16 %v140
    %v183 = vunpack.c.l.b16 %v141
    %v184 = vunpack.c.l.b16 %v142
    %v185 = vunpack.c.l.b16 %v143
    %v186 = vunpack.c.l.b16 %v144
    %v187 = vunpack.c.l.b16 %v145
    %v188 = vunpack.c.l.b16 %v146
    %v189 = vunpack.c.l.b16 %v147
    %v190 = vunpack.c.l.b16 %v148
    %v191 = vunpack.c.l.b16 %v149
    %v192 = vunpack.c.l.b16 %v150
    %v193 = vpack.c.b16 %v178, %v177
    %v194 = vpack.c.b16 %v180, %v179
    %v195 = vpack.c.b16 %v182, %v181
    %v196 = vpack.c.b16 %v184, %v183
    %v197 = vpack.c.b16 %v186, %v185
    %v198 = vpack.c.b16 %v188, %v187
    %v199 = vpack.c.b16 %v190, %v189
    %v200 = vpack.c.b16 %v192, %v191
    %209 = vmatpush.bf16.msra.mxu0 %v200
    %210 = vmatpush.bf16.msra.mxu0 %v199
    %211 = vmatpush.bf16.msra.mxu0 %v198
    %212 = vmatpush.bf16.msra.mxu0 %v197
    %213 = vmatpush.bf16.msra.mxu0 %v196
    %214 = vmatpush.bf16.msra.mxu0 %v195
    %215 = vmatpush.bf16.msra.mxu0 %v194
    %216 = vmatpush.bf16.msra.mxu0 %v193
    %217 = vmatmul.bf16.gmra.mxu0 %v159
    %v218 = vpop.f32.mrf.mxu0
    %v219 = vadd.f32 %v153, %v218
    %v220 = vpop.f32.mrf.mxu0
    %v221 = vadd.f32 %v153, %v220
    %222 = vdwg.mxu0
    %v223 = vmax.f32 %v219, 0.0
    %v224 = vmax.f32 %v221, 0.0
    %v225 = vpack.c.bf16 %v224, %v223
    %v226 = vld [vmem:[#allocation7] sm:$0xf]
    %v227 = vld [vmem:[#allocation7 + $0x4] sm:$0xf]
    %v228 = vld [vmem:[#allocation7 + $0x8] sm:$0xf]
    %v229 = vld [vmem:[#allocation7 + $0xc] sm:$0xf]
    %v230 = vld [vmem:[#allocation7 + $0x10] sm:$0xf]
    %v231 = vld [vmem:[#allocation7 + $0x14] sm:$0xf]
    %v232 = vld [vmem:[#allocation7 + $0x18] sm:$0xf]
    %v233 = vld [vmem:[#allocation7 + $0x1c] sm:$0xf]
    %v234 = vld [vmem:[#allocation7 + $0x20] sm:$0xf]
    %v235 = vld [vmem:[#allocation7 + $0x24] sm:$0xf]
    %v236 = vld [vmem:[#allocation7 + $0x28] sm:$0xf]
    %v237 = vld [vmem:[#allocation7 + $0x2c] sm:$0xf]
    %v238 = vld [vmem:[#allocation7 + $0x30] sm:$0xf]
    %v239 = vld [vmem:[#allocation7 + $0x34] sm:$0xf]
    %v240 = vld [vmem:[#allocation7 + $0x38] sm:$0xf]
    %v241 = vld [vmem:[#allocation7 + $0x3c] sm:$0xf]
    %v242 = vld [vmem:[%s4] sm:$0x1]
    %v244 = vperm.slane %v242, 0
    %v262 = vunpack.c.l.b16 %v226
    %v263 = vunpack.c.l.b16 %v227
    %v264 = vunpack.c.l.b16 %v228
    %v265 = vunpack.c.l.b16 %v229
    %v266 = vunpack.c.l.b16 %v230
    %v267 = vunpack.c.l.b16 %v231
    %v268 = vunpack.c.l.b16 %v232
    %v269 = vunpack.c.l.b16 %v233
    %v270 = vunpack.c.l.b16 %v234
    %v271 = vunpack.c.l.b16 %v235
    %v272 = vunpack.c.l.b16 %v236
    %v273 = vunpack.c.l.b16 %v237
    %v274 = vunpack.c.l.b16 %v238
    %v275 = vunpack.c.l.b16 %v239
    %v276 = vunpack.c.l.b16 %v240
    %v277 = vunpack.c.l.b16 %v241
    %v278 = vpack.c.b16 %v263, %v262
    %v279 = vpack.c.b16 %v265, %v264
    %v280 = vpack.c.b16 %v267, %v266
    %v281 = vpack.c.b16 %v269, %v268
    %v282 = vpack.c.b16 %v271, %v270
    %v283 = vpack.c.b16 %v273, %v272
    %v284 = vpack.c.b16 %v275, %v274
    %v285 = vpack.c.b16 %v277, %v276
    %294 = vmatpush.bf16.msra.mxu0 %v285
    %295 = vmatpush.bf16.msra.mxu0 %v284
    %296 = vmatpush.bf16.msra.mxu0 %v283
    %297 = vmatpush.bf16.msra.mxu0 %v282
    %298 = vmatpush.bf16.msra.mxu0 %v281
    %299 = vmatpush.bf16.msra.mxu0 %v280
    %300 = vmatpush.bf16.msra.mxu0 %v279
    %301 = vmatpush.bf16.msra.mxu0 %v278
    %302 = vmatmul.bf16.gmra.mxu0 %v225
    %v303 = vpop.f32.mrf.mxu0
    %v304 = vadd.f32 %v244, %v303
    %v305 = vpop.f32.mrf.mxu0
    %v306 = vadd.f32 %v244, %v305
    %307 = vdwg.mxu0
    %v308 = vmax.f32 %v304, 0.0
    %v309 = vmax.f32 %v306, 0.0
    %v310 = vpack.c.bf16 %v309, %v308
    %v311 = vld [vmem:[#allocation8] sm:$0xf]
    %v312 = vld [vmem:[#allocation8 + $0x4] sm:$0xf]
    %v313 = vld [vmem:[#allocation8 + $0x8] sm:$0xf]
    %v314 = vld [vmem:[#allocation8 + $0xc] sm:$0xf]
    %v315 = vld [vmem:[#allocation8 + $0x10] sm:$0xf]
    %v316 = vld [vmem:[#allocation8 + $0x14] sm:$0xf]
    %v317 = vld [vmem:[#allocation8 + $0x18] sm:$0xf]
    %v318 = vld [vmem:[#allocation8 + $0x1c] sm:$0xf]
    %v319 = vld [vmem:[#allocation8 + $0x20] sm:$0xf]
    %v320 = vld [vmem:[#allocation8 + $0x24] sm:$0xf]
    %v321 = vld [vmem:[#allocation8 + $0x28] sm:$0xf]
    %v322 = vld [vmem:[#allocation8 + $0x2c] sm:$0xf]
    %v323 = vld [vmem:[#allocation8 + $0x30] sm:$0xf]
    %v324 = vld [vmem:[#allocation8 + $0x34] sm:$0xf]
    %v325 = vld [vmem:[#allocation8 + $0x38] sm:$0xf]
    %v326 = vld [vmem:[#allocation8 + $0x3c] sm:$0xf]
    %v327 = vld [vmem:[%s6] sm:$0x1]
    %v329 = vperm.slane %v327, 0
    %v347 = vunpack.c.l.b16 %v311
    %v348 = vunpack.c.l.b16 %v312
    %v349 = vunpack.c.l.b16 %v313
    %v350 = vunpack.c.l.b16 %v314
    %v351 = vunpack.c.l.b16 %v315
    %v352 = vunpack.c.l.b16 %v316
    %v353 = vunpack.c.l.b16 %v317
    %v354 = vunpack.c.l.b16 %v318
    %v355 = vunpack.c.l.b16 %v319
    %v356 = vunpack.c.l.b16 %v320
    %v357 = vunpack.c.l.b16 %v321
    %v358 = vunpack.c.l.b16 %v322
    %v359 = vunpack.c.l.b16 %v323
    %v360 = vunpack.c.l.b16 %v324
    %v361 = vunpack.c.l.b16 %v325
    %v362 = vunpack.c.l.b16 %v326
    %v363 = vpack.c.b16 %v348, %v347
    %v364 = vpack.c.b16 %v350, %v349
    %v365 = vpack.c.b16 %v352, %v351
    %v366 = vpack.c.b16 %v354, %v353
    %v367 = vpack.c.b16 %v356, %v355
    %v368 = vpack.c.b16 %v358, %v357
    %v369 = vpack.c.b16 %v360, %v359
    %v370 = vpack.c.b16 %v362, %v361
    %379 = vmatpush.bf16.msra.mxu0 %v370
    %380 = vmatpush.bf16.msra.mxu0 %v369
    %381 = vmatpush.bf16.msra.mxu0 %v368
    %382 = vmatpush.bf16.msra.mxu0 %v367
    %383 = vmatpush.bf16.msra.mxu0 %v366
    %384 = vmatpush.bf16.msra.mxu0 %v365
    %385 = vmatpush.bf16.msra.mxu0 %v364
    %386 = vmatpush.bf16.msra.mxu0 %v363
    %387 = vmatmul.bf16.gmra.mxu0 %v310
    %v388 = vpop.f32.mrf.mxu0
    %v389 = vadd.f32 %v329, %v388
    %v390 = vpop.f32.mrf.mxu0
    %v391 = vadd.f32 %v329, %v390
    %392 = vdwg.mxu0
    %v393 = vmax.f32 %v389, 0.0
    %v394 = vmax.f32 %v391, 0.0
    %v395 = vpack.c.bf16 %v394, %v393
    %v396 = vld [vmem:[#allocation10] sm:$0xf]
    %v397 = vld [vmem:[#allocation10 + $0x4] sm:$0xf]
    %v398 = vld [vmem:[#allocation10 + $0x8] sm:$0xf]
    %v399 = vld [vmem:[#allocation10 + $0xc] sm:$0xf]
    %v400 = vld [vmem:[#allocation10 + $0x10] sm:$0xf]
    %v401 = vld [vmem:[#allocation10 + $0x14] sm:$0xf]
    %v402 = vld [vmem:[#allocation10 + $0x18] sm:$0xf]
    %v403 = vld [vmem:[#allocation10 + $0x1c] sm:$0xf]
    %v404 = vld [vmem:[#allocation10 + $0x20] sm:$0xf]
    %v405 = vld [vmem:[#allocation10 + $0x24] sm:$0xf]
    %v406 = vld [vmem:[#allocation10 + $0x28] sm:$0xf]
    %v407 = vld [vmem:[#allocation10 + $0x2c] sm:$0xf]
    %v408 = vld [vmem:[#allocation10 + $0x30] sm:$0xf]
    %v409 = vld [vmem:[#allocation10 + $0x34] sm:$0xf]
    %v410 = vld [vmem:[#allocation10 + $0x38] sm:$0xf]
    %v411 = vld [vmem:[#allocation10 + $0x3c] sm:$0xf]
    %v412 = vld [vmem:[%s8] sm:$0x1]
    %v414 = vperm.slane %v412, 0
    %v432 = vunpack.c.l.b16 %v396
    %v433 = vunpack.c.l.b16 %v397
    %v434 = vunpack.c.l.b16 %v398
    %v435 = vunpack.c.l.b16 %v399
    %v436 = vunpack.c.l.b16 %v400
    %v437 = vunpack.c.l.b16 %v401
    %v438 = vunpack.c.l.b16 %v402
    %v439 = vunpack.c.l.b16 %v403
    %v440 = vunpack.c.l.b16 %v404
    %v441 = vunpack.c.l.b16 %v405
    %v442 = vunpack.c.l.b16 %v406
    %v443 = vunpack.c.l.b16 %v407
    %v444 = vunpack.c.l.b16 %v408
    %v445 = vunpack.c.l.b16 %v409
    %v446 = vunpack.c.l.b16 %v410
    %v447 = vunpack.c.l.b16 %v411
    %v448 = vpack.c.b16 %v433, %v432
    %v449 = vpack.c.b16 %v435, %v434
    %v450 = vpack.c.b16 %v437, %v436
    %v451 = vpack.c.b16 %v439, %v438
    %v452 = vpack.c.b16 %v441, %v440
    %v453 = vpack.c.b16 %v443, %v442
    %v454 = vpack.c.b16 %v445, %v444
    %v455 = vpack.c.b16 %v447, %v446
    %464 = vmatpush.bf16.msra.mxu0 %v455
    %465 = vmatpush.bf16.msra.mxu0 %v454
    %466 = vmatpush.bf16.msra.mxu0 %v453
    %467 = vmatpush.bf16.msra.mxu0 %v452
    %468 = vmatpush.bf16.msra.mxu0 %v451
    %469 = vmatpush.bf16.msra.mxu0 %v450
    %470 = vmatpush.bf16.msra.mxu0 %v449
    %471 = vmatpush.bf16.msra.mxu0 %v448
    %472 = vmatmul.bf16.gmra.mxu0 %v395
    %v473 = vpop.f32.mrf.mxu0
    %v474 = vadd.f32 %v414, %v473
    %v475 = vpop.f32.mrf.mxu0
    %v476 = vadd.f32 %v414, %v475
    %477 = vdwg.mxu0
    %v478 = vmax.f32 %v474, 0.0
    %v479 = vmax.f32 %v476, 0.0
    %v480 = vpack.c.bf16 %v479, %v478
    %v481 = vld [vmem:[#allocation11] sm:$0xf]
    %v482 = vld [vmem:[#allocation11 + $0x4] sm:$0xf]
    %v483 = vld [vmem:[#allocation11 + $0x8] sm:$0xf]
    %v484 = vld [vmem:[#allocation11 + $0xc] sm:$0xf]
    %v485 = vld [vmem:[#allocation11 + $0x10] sm:$0xf]
    %v486 = vld [vmem:[#allocation11 + $0x14] sm:$0xf]
    %v487 = vld [vmem:[#allocation11 + $0x18] sm:$0xf]
    %v488 = vld [vmem:[#allocation11 + $0x1c] sm:$0xf]
    %v489 = vld [vmem:[#allocation11 + $0x20] sm:$0xf]
    %v490 = vld [vmem:[#allocation11 + $0x24] sm:$0xf]
    %v491 = vld [vmem:[#allocation11 + $0x28] sm:$0xf]
    %v492 = vld [vmem:[#allocation11 + $0x2c] sm:$0xf]
    %v493 = vld [vmem:[#allocation11 + $0x30] sm:$0xf]
    %v494 = vld [vmem:[#allocation11 + $0x34] sm:$0xf]
    %v495 = vld [vmem:[#allocation11 + $0x38] sm:$0xf]
    %v496 = vld [vmem:[#allocation11 + $0x3c] sm:$0xf]
    %v497 = vld [vmem:[%s10] sm:$0x1]
    %v499 = vperm.slane %v497, 0
    %v517 = vunpack.c.l.b16 %v481
    %v518 = vunpack.c.l.b16 %v482
    %v519 = vunpack.c.l.b16 %v483
    %v520 = vunpack.c.l.b16 %v484
    %v521 = vunpack.c.l.b16 %v485
    %v522 = vunpack.c.l.b16 %v486
    %v523 = vunpack.c.l.b16 %v487
    %v524 = vunpack.c.l.b16 %v488
    %v525 = vunpack.c.l.b16 %v489
    %v526 = vunpack.c.l.b16 %v490
    %v527 = vunpack.c.l.b16 %v491
    %v528 = vunpack.c.l.b16 %v492
    %v529 = vunpack.c.l.b16 %v493
    %v530 = vunpack.c.l.b16 %v494
    %v531 = vunpack.c.l.b16 %v495
    %v532 = vunpack.c.l.b16 %v496
    %v533 = vpack.c.b16 %v518, %v517
    %v534 = vpack.c.b16 %v520, %v519
    %v535 = vpack.c.b16 %v522, %v521
    %v536 = vpack.c.b16 %v524, %v523
    %v537 = vpack.c.b16 %v526, %v525
    %v538 = vpack.c.b16 %v528, %v527
    %v539 = vpack.c.b16 %v530, %v529
    %v540 = vpack.c.b16 %v532, %v531
    %549 = vmatpush.bf16.msra.mxu0 %v540
    %550 = vmatpush.bf16.msra.mxu0 %v539
    %551 = vmatpush.bf16.msra.mxu0 %v538
    %552 = vmatpush.bf16.msra.mxu0 %v537
    %553 = vmatpush.bf16.msra.mxu0 %v536
    %554 = vmatpush.bf16.msra.mxu0 %v535
    %555 = vmatpush.bf16.msra.mxu0 %v534
    %556 = vmatpush.bf16.msra.mxu0 %v533
    %557 = vmatmul.bf16.gmra.mxu0 %v480
    %v558 = vpop.f32.mrf.mxu0
    %v559 = vadd.f32 %v499, %v558
    %v560 = vpop.f32.mrf.mxu0
    %v561 = vadd.f32 %v499, %v560
    %562 = vdwg.mxu0
    %v563 = vmul.f32 %v559, 0.5
    %v564 = vmul.f32 %v561, 0.5
    %v565 = vtanh.pop %v563
    %v566 = vtanh.pop %v564
    %v567 = vadd.f32 %v565, 1.0
    %v568 = vadd.f32 %v566, 1.0
    %v569 = vmul.f32 %v567, 0.5
    %v570 = vmul.f32 %v568, 0.5
    %v571 = vpack.c.bf16 %v569, %v569
    %v572 = vpack.c.bf16 %v570, %v570
    %573 = vst [vmem:[#allocation13] sm:$0xf] %v571
    %574 = vst [vmem:[#allocation13 + $0x4] sm:$0xf] %v572
    // Predicated region
    $region70: #{tpu_custom_call.1} parent=1 // pred_check
      _
    $region71: #{tpu_custom_call.1} parent=1 // pred_check_branch
      %576 = sbr.rel (0) target = $region73
    $region72: #{tpu_custom_call.1} parent=1 // pred_region
      %578 = vsyncadd [#allocation4], 0
      %s579 = sshll.u32 [#allocation13], 4
      %s580 = int_to_ptr.vmem [resolvable:$true] %s579
      %s581 = sshll.u32 %s11, 4
      %s582 = int_to_ptr.hbm [resolvable:$true] %s581
      %587 = dma.vmem_to_hbm [thread:$0]  %s580, 128, %s582, [#allocation4], 64, 64, 4
    $region73: #{tpu_custom_call.1} parent=1 // pred_fallthru
      _
    // Predicated region
    $region74: #{tpu_custom_call.1} parent=1 // pred_check
      _
    $region75: #{tpu_custom_call.1} parent=1 // pred_check_branch
      %589 = sbr.rel (0) target = $region77
    $region76: #{tpu_custom_call.1} parent=1 // pred_region
      %591 = dma.done [#allocation4], 128
    $region77: #{tpu_custom_call.1} parent=1 // pred_fallthru
      _
    %592 = vsyncpa [#allocation3], 1
    %593 = vsyncpa [#allocation6], 1
    %594 = vsyncpa [#allocation9], 1
    %595 = vsyncpa [#allocation12], 1
    %596 = vsyncpa [#allocation4], 1

</llo_original>
